<compile_context>
chip_gen: v7x
topology: tpu7x:2x2x1
jax: 0.10.0
libtpu: 0.0.40
codegen_flags: <defaults>
</compile_context>

<pallas_src>
import functools

import jax
import jax.numpy as jnp
from jax.experimental import pallas as pl
from jax.experimental.pallas import tpu as pltpu

IN_DIM = 768
HID_DIM = 128
OUT_DIM = 1
LANES = 128          # vreg lane width; batch tiles are multiples of this
DEFAULT_TB = 4096    # 4096*768*4 B = 12 MiB per x tile, 24 MiB double-buffered


def _round_up(x, m):
    return (x + m - 1) // m * m


def mlp_kernel(x_ref, w1_ref, b1_ref, w2_ref, b2_ref, o_ref, *, compute_dtype=None):
    x = x_ref[...]
    w1 = w1_ref[...]
    if compute_dtype is not None:
        # Optional bf16 MXU path (f32 accumulation kept via preferred_element_type).
        # ~1e-3 relative error; removes the f32 multi-pass MXU decomposition.
        x = x.astype(compute_dtype)
        w1 = w1.astype(compute_dtype)
    # Layer 1 on the MXU: (TB, 768) @ (768, 128) with f32 accumulation.
    h = jnp.dot(x, w1, preferred_element_type=jnp.float32)
    # Bias + ReLU on the VPU.
    h = jnp.maximum(h + b1_ref[...], 0.0)
    # Layer 2 (single output unit): broadcast-multiply by the w2 row (VPU) and reduce
    # over the hidden dim (XLU).  The result is produced LANE-DENSE: out[g, l] holds
    # batch row g*128 + l, so the store is an unmasked vst and the writeback DMA is
    # contiguous.  The (TB,128)->(TB//128,128,128) reshape only splits the leading dim
    # (tile-aligned, free); the reduce/relayout rides the otherwise-idle XLU slot.
    _, g, lanes = o_ref.shape                    # block is (1, TB//128, 128)
    h3 = h.reshape(g, lanes, HID_DIM)
    out = jnp.sum(h3 * w2_ref[...], axis=-1)     # (TB//128, 128)
    # Scalar output bias read from SMEM.
    o_ref[0] = out + b2_ref[0, 0]


def mlp_forward(x, w1, b1, w2, b2, *, tb=DEFAULT_TB, compute_dtype=None):
    """x: (B, 768) f32 (or bf16 from the producer); w1: (768, 128); b1: (1, 128);
    w2: (1, 128); b2: (1, 1).  Returns (B, 1) f32."""
    B = x.shape[0]
    # Lane-dense output needs batch tiles that are multiples of 128.  Tiny batches
    # (< 128 rows) are padded up to one tile (negligible cost); larger batches are
    # NEVER padded -- the ragged last tile is clipped by Pallas and the garbage rows
    # end up in output positions >= B, which the wrapper slices off.
    if B < LANES:
        x = jnp.pad(x, ((0, LANES - B), (0, 0)))
    B_eff = x.shape[0]
    TB = min(_round_up(tb, LANES), (B_eff // LANES) * LANES)
    grid = (pl.cdiv(B_eff, TB),)
    Bp = grid[0] * TB

    cost = pl.CostEstimate(
        flops=2 * Bp * IN_DIM * HID_DIM + 2 * Bp * HID_DIM,
        transcendentals=0,
        bytes_accessed=(
            B_eff * IN_DIM * x.dtype.itemsize   # x reads (dominant HBM traffic)
            + IN_DIM * HID_DIM * 4              # w1
            + 2 * HID_DIM * 4 + 4               # b1, w2, b2
            + Bp * 4                            # output
        ),
    )

    kernel = functools.partial(mlp_kernel, compute_dtype=compute_dtype)

    out = pl.pallas_call(
        kernel,
        # Lane-dense output: element (i, g, l) is batch row i*TB + g*128 + l.
        out_shape=jax.ShapeDtypeStruct((grid[0], TB // LANES, LANES), jnp.float32),
        grid=grid,
        in_specs=[
            # x: batch-tiled -> Pallas double-buffers the HBM->VMEM stream.
            pl.BlockSpec((TB, IN_DIM), lambda i: (i, 0)),
            # Weights / layer-1 bias / layer-2 row: constant block index -> VMEM
            # resident across the whole grid (no re-DMA per step).
            pl.BlockSpec((IN_DIM, HID_DIM), lambda i: (0, 0)),
            pl.BlockSpec((1, HID_DIM), lambda i: (0, 0)),
            pl.BlockSpec((1, HID_DIM), lambda i: (0, 0)),
            # Scalar output bias in SMEM.
            pl.BlockSpec(memory_space=pltpu.MemorySpace.SMEM),
        ],
        out_specs=pl.BlockSpec((1, TB // LANES, LANES), lambda i: (i, 0, 0)),
        compiler_params=pltpu.CompilerParams(
            # Independent batch tiles -> megacore-shardable.
            # TODO(synk): on v7x, verify with xprof that both TensorCores pick up the
            # batch grid; if not, switch this axis to pltpu.CORE_PARALLEL.
            dimension_semantics=("parallel",),
            # 24 MiB double-buffered x at TB=4096 + ~0.4 MiB weights + small dense
            # output: fits v5e/v6e (128 MiB) and v7x (64 MiB) with headroom.
            vmem_limit_bytes=48 << 20,
        ),
        cost_estimate=cost,
    )(x, w1, b1, w2, b2)

    # (grid, TB//128, 128) -> (Bp, 1) is a free contiguous reshape; drop padded rows.
    return out.reshape(Bp, OUT_DIM)[:B]


def init_params(key):
    """Deterministic init mirroring PyTorch nn.Linear defaults:
    U(-1/sqrt(fan_in), 1/sqrt(fan_in)) for both weights and biases."""
    k1, k2, k3, k4 = jax.random.split(key, 4)
    bound1 = 1.0 / jnp.sqrt(jnp.float32(IN_DIM))
    bound2 = 1.0 / jnp.sqrt(jnp.float32(HID_DIM))
    # w1 stored (in, out) -- transpose of PyTorch's (out, in) -- for a row-major matmul.
    w1 = jax.random.uniform(k1, (IN_DIM, HID_DIM), jnp.float32, -bound1, bound1)
    b1 = jax.random.uniform(k2, (1, HID_DIM), jnp.float32, -bound1, bound1)
    # w2 stored as a row (1, hid) -- same as PyTorch's (out, in) = (1, 128).
    w2 = jax.random.uniform(k3, (1, HID_DIM), jnp.float32, -bound2, bound2)
    b2 = jax.random.uniform(k4, (1, OUT_DIM), jnp.float32, -bound2, bound2)
    return w1, b1, w2, b2


def _reference(x, w1, b1, w2, b2):
    h = jnp.maximum(jnp.dot(x, w1, precision="highest") + b1, 0.0)
    return jnp.dot(h, w2.T, precision="highest") + b2


if __name__ == "__main__":
    key = jax.random.PRNGKey(0)
    k_x1, k_x2, k_x3, k_p = jax.random.split(key, 4)
    w1, b1, w2, b2 = init_params(k_p)

    # 1) Exact-fit batch: single 256-row tile, no padding, no ragged blocks.
    B1 = 256
    x1 = jax.random.normal(k_x1, (B1, IN_DIM), jnp.float32)
    out1 = jax.block_until_ready(mlp_forward(x1, w1, b1, w2, b2))
    ref1 = _reference(x1, w1, b1, w2, b2)
    assert out1.shape == (B1, OUT_DIM)
    assert jnp.allclose(out1, ref1, atol=1e-3, rtol=1e-3)

    # 2) Ragged batch, multi-tile grid (grid=2, last tile clipped), no wrapper pad.
    B2 = 200
    x2 = jax.random.normal(k_x2, (B2, IN_DIM), jnp.float32)
    out2 = jax.block_until_ready(mlp_forward(x2, w1, b1, w2, b2, tb=128))
    ref2 = _reference(x2, w1, b1, w2, b2)
    assert out2.shape == (B2, OUT_DIM)
    assert jnp.allclose(out2, ref2, atol=1e-3, rtol=1e-3)

    # 3) Tiny batch (< 128 -> padded to one tile) exercising the optional bf16 MXU path.
    B3 = 8
    x3 = jax.random.normal(k_x3, (B3, IN_DIM), jnp.float32)
    out3 = jax.block_until_ready(
        mlp_forward(x3, w1, b1, w2, b2, compute_dtype=jnp.bfloat16))
    ref3 = _reference(x3, w1, b1, w2, b2)
    assert out3.shape == (B3, OUT_DIM)
    assert jnp.allclose(out3, ref3, atol=1e-1, rtol=1e-1)

    print("KERNEL_OK")
</pallas_src>

<mosaic_0001>
module attributes {stable_mosaic.version = 11 : i64} {
  func.func @mlp_kernel(%arg0: i32, %arg1: memref<256x768xf32, #tpu.memory_space<vmem>>, %arg2: memref<768x128xf32, #tpu.memory_space<vmem>>, %arg3: memref<1x128xf32, #tpu.memory_space<vmem>>, %arg4: memref<1x128xf32, #tpu.memory_space<vmem>>, %arg5: memref<1x1xf32, #tpu.memory_space<smem>>, %arg6: memref<1x2x128xf32, #tpu.memory_space<vmem>>) attributes {dimension_semantics = [#tpu.dimension_semantics<parallel>], iteration_bounds = array<i64: 1>, scalar_prefetch = 0 : i64, scratch_operands = 0 : i64, tpu.core_type = #tpu.core_type<tc>, window_params = [{transform_indices = @transform_0, window_bounds = array<i64: 256, 768>}, {pipeline_mode = #tpu.pipeline_mode<synchronous>, transform_indices = @transform_1, window_bounds = array<i64: 768, 128>}, {pipeline_mode = #tpu.pipeline_mode<synchronous>, transform_indices = @transform_2, window_bounds = array<i64: 1, 128>}, {pipeline_mode = #tpu.pipeline_mode<synchronous>, transform_indices = @transform_3, window_bounds = array<i64: 1, 128>}, {transform_indices = @transform_4, window_bounds = array<i64: 1, 1>}, {transform_indices = @transform_5, window_bounds = array<i64: 1, 2, 128>}]} {
    %c0 = arith.constant 0 : index
    %c0_0 = arith.constant 0 : index
    %0 = vector.load %arg1[%c0, %c0_0] : memref<256x768xf32, #tpu.memory_space<vmem>>, vector<256x768xf32>
    %c0_1 = arith.constant 0 : index
    %c0_2 = arith.constant 0 : index
    %1 = vector.load %arg2[%c0_1, %c0_2] : memref<768x128xf32, #tpu.memory_space<vmem>>, vector<768x128xf32>
    %cst = arith.constant dense<0.000000e+00> : vector<256x128xf32>
    %2 = tpu.matmul %0, %1, %cst {dimension_numbers = #tpu.dot_dimension_numbers<[1], [0], [0], [1], [0, 0, 1, 1], [], []>} : vector<256x768xf32>, vector<768x128xf32>, vector<256x128xf32> -> vector<256x128xf32>
    %c0_3 = arith.constant 0 : index
    %c0_4 = arith.constant 0 : index
    %3 = vector.load %arg3[%c0_3, %c0_4] : memref<1x128xf32, #tpu.memory_space<vmem>>, vector<1x128xf32>
    %4 = vector.broadcast %3 : vector<1x128xf32> to vector<256x128xf32>
    %5 = arith.addf %2, %4 : vector<256x128xf32>
    %cst_5 = arith.constant 0.000000e+00 : f32
    %6 = vector.broadcast %cst_5 : f32 to vector<256x128xf32>
    %7 = arith.maximumf %5, %6 : vector<256x128xf32>
    %8 = vector.shape_cast %7 : vector<256x128xf32> to vector<2x128x128xf32>
    %c0_6 = arith.constant 0 : index
    %c0_7 = arith.constant 0 : index
    %9 = vector.load %arg4[%c0_6, %c0_7] : memref<1x128xf32, #tpu.memory_space<vmem>>, vector<1x128xf32>
    %10 = vector.shape_cast %9 : vector<1x128xf32> to vector<1x1x128xf32>
    %11 = vector.broadcast %10 : vector<1x1x128xf32> to vector<2x128x128xf32>
    %12 = arith.mulf %8, %11 : vector<2x128x128xf32>
    %cst_8 = arith.constant dense<0.000000e+00> : vector<2x128xf32>
    %13 = vector.multi_reduction <add>, %12, %cst_8 [2] : vector<2x128x128xf32> to vector<2x128xf32>
    %c0_9 = arith.constant 0 : index
    %c0_10 = arith.constant 0 : index
    %14 = memref.load %arg5[%c0_9, %c0_10] : memref<1x1xf32, #tpu.memory_space<smem>>
    %15 = vector.broadcast %14 : f32 to vector<2x128xf32>
    %16 = arith.addf %13, %15 : vector<2x128xf32>
    %c0_11 = arith.constant 0 : index
    %c0_12 = arith.constant 0 : index
    %c0_13 = arith.constant 0 : index
    %17 = vector.load %arg6[%c0_11, %c0_12, %c0_13] : memref<1x2x128xf32, #tpu.memory_space<vmem>>, vector<1x2x128xf32>
    %18 = vector.shape_cast %17 : vector<1x2x128xf32> to vector<2x128xf32>
    %19 = vector.shape_cast %16 : vector<2x128xf32> to vector<1x2x128xf32>
    tpu.vector_store %arg6[%c0_11, %c0_12, %c0_13], %19 {strides = array<i32>} : memref<1x2x128xf32, #tpu.memory_space<vmem>>, vector<1x2x128xf32>,
    return
  }
  func.func @transform_0(%arg0: i32) -> (i32, i32) {
    %c0_i32 = arith.constant 0 : i32
    %c0_i32_0 = arith.constant 0 : i32
    return %arg0, %c0_i32 : i32, i32
  }
  func.func @transform_1(%arg0: i32) -> (i32, i32) {
    %c0_i32 = arith.constant 0 : i32
    %c0_i32_0 = arith.constant 0 : i32
    %c0_i32_1 = arith.constant 0 : i32
    return %c0_i32, %c0_i32_0 : i32, i32
  }
  func.func @transform_2(%arg0: i32) -> (i32, i32) {
    %c0_i32 = arith.constant 0 : i32
    %c0_i32_0 = arith.constant 0 : i32
    %c0_i32_1 = arith.constant 0 : i32
    return %c0_i32, %c0_i32_0 : i32, i32
  }
  func.func @transform_3(%arg0: i32) -> (i32, i32) {
    %c0_i32 = arith.constant 0 : i32
    %c0_i32_0 = arith.constant 0 : i32
    %c0_i32_1 = arith.constant 0 : i32
    return %c0_i32, %c0_i32_0 : i32, i32
  }
  func.func @transform_4(%arg0: i32) -> (i32, i32) {
    %c0_i32 = arith.constant 0 : i32
    %c0_i32_0 = arith.constant 0 : i32
    %c0_i32_1 = arith.constant 0 : i32
    return %c0_i32, %c0_i32_0 : i32, i32
  }
  func.func @transform_5(%arg0: i32) -> (i32, i32, i32) {
    %c0_i32 = arith.constant 0 : i32
    %c0_i32_0 = arith.constant 0 : i32
    %c0_i32_1 = arith.constant 0 : i32
    return %arg0, %c0_i32, %c0_i32_0 : i32, i32, i32
  }
}

</mosaic_0001>

<llo_original>
// kernel: tpu_custom_call.1
$region0: #{tpu_custom_call.1}
  #allocation0 [shape = 'u32[]', space=smem, size = 0x4, offset = 0x4, fixed_abs, tag = 'smem constant byte address 0x4 - core index']
  #allocation1 [shape = 'u32[144,128]{1,0:T(1,128)}', space=vmem, size = 0x12000, scoped, tag = 'internal scratch']
  #allocation2 [shape = 'f32[1,1]{1,0:T(1,128)S(6)}', space=smem, size = 0x200, scoped, tag = 'scoped memory for tpu_custom_call.1']
  %s0 = inlined_call_operand.hbm [shape: f32[256,768], index: 0, kind: input, shape index: {}]
  %s1 = inlined_call_operand.hbm [shape: f32[768,128], index: 1, kind: input, shape index: {}]
  %s2 = inlined_call_operand.vmem [shape: f32[1,128], index: 2, kind: input, shape index: {}]
  %s3 = inlined_call_operand.vmem [shape: f32[1,128], index: 3, kind: input, shape index: {}]
  %s4 = inlined_call_operand.<no memory space> [shape: f32[1,1], index: 4, kind: input, shape index: {}]
  %s5 = inlined_call_operand.hbm [shape: f32[1,2,128], index: 5, kind: output, shape index: {}]
  %s6 = sld [smem:[#allocation0]]
  $region38: #{tpu_custom_call.1} parent=0
    _
  %s8 = ssub.s32 1, %s6
  %s9 = scalar_select 0, %s8, %s6
  %10 = sst [smem:[#allocation2]] %s4
  $region1: #{tpu_custom_call.1} parent=0
    #allocation3 [shape = 'u8[786432]{0}', space=vmem, size = 0xc0000, scoped, tag = 'input window, operand 0, single buffered']
    #allocation4 [shape = 's32[1]{0}', space=sflag, size = 0x4, scoped, tag = 'scoped memory for tpu_custom_call.1']
    #allocation5 [shape = 's32[1]{0}', space=sflag, size = 0x4, scoped, tag = 'scoped memory for tpu_custom_call.1']
    #allocation6 [shape = 'u8[393216]{0}', space=vmem, size = 0x60000, scoped, tag = 'input window, operand 1, single buffered']
    #allocation7 [shape = 's32[1]{0}', space=sflag, size = 0x4, scoped, tag = 'scoped memory for tpu_custom_call.1']
    #allocation8 [shape = 'u8[1024]{0}', space=vmem, size = 0x400, scoped, tag = 'output window, operand 0, single buffered']
    %11 = vsyncpa [#allocation4], 0
    %12 = vsyncpa [#allocation7], 0
    %13 = vsyncpa [#allocation5], 0
    // Predicated region
    $region2: #{tpu_custom_call.1} parent=1 // pred_check
      _
    $region3: #{tpu_custom_call.1} parent=1 // pred_check_branch
      %15 = sbr.rel (0) target = $region5
    $region4: #{tpu_custom_call.1} parent=1 // pred_region
      %s17 = ssub.s32 24576, 24576
      %18 = vsyncadd [#allocation4], %s17
      %s19 = sshll.u32 [#allocation3], 4
      %s20 = int_to_ptr.vmem [resolvable:$true] %s19
      %25 = dma.hbm_to_vmem [thread:$0]  %s0, 24576, %s20, [#allocation4], 768, 768, 48
    $region5: #{tpu_custom_call.1} parent=1 // pred_fallthru
      _
    // Predicated region
    $region6: #{tpu_custom_call.1} parent=1 // pred_check
      _
    $region7: #{tpu_custom_call.1} parent=1 // pred_check_branch
      %27 = sbr.rel (0) target = $region9
    $region8: #{tpu_custom_call.1} parent=1 // pred_region
      %s29 = ssub.s32 12288, 12288
      %30 = vsyncadd [#allocation7], %s29
      %s31 = sshll.u32 [#allocation6], 4
      %s32 = int_to_ptr.vmem [resolvable:$true] %s31
      %37 = dma.hbm_to_vmem [thread:$0]  %s1, 12288, %s32, [#allocation7], 128, 128, 8
    $region9: #{tpu_custom_call.1} parent=1 // pred_fallthru
      _
    // Predicated region
    $region10: #{tpu_custom_call.1} parent=1 // pred_check
      _
    $region11: #{tpu_custom_call.1} parent=1 // pred_check_branch
      %39 = sbr.rel (0) target = $region13
    $region12: #{tpu_custom_call.1} parent=1 // pred_region
      _
    $region13: #{tpu_custom_call.1} parent=1 // pred_fallthru
      _
    // Predicated region
    $region14: #{tpu_custom_call.1} parent=1 // pred_check
      _
    $region15: #{tpu_custom_call.1} parent=1 // pred_check_branch
      %41 = sbr.rel (0) target = $region17
    $region16: #{tpu_custom_call.1} parent=1 // pred_region
      _
    $region17: #{tpu_custom_call.1} parent=1 // pred_fallthru
      _
    // Predicated region
    $region18: #{tpu_custom_call.1} parent=1 // pred_check
      _
    $region19: #{tpu_custom_call.1} parent=1 // pred_check_branch
      %43 = sbr.rel (0) target = $region21
    $region20: #{tpu_custom_call.1} parent=1 // pred_region
      _
    $region21: #{tpu_custom_call.1} parent=1 // pred_fallthru
      _
    // Predicated region
    $region22: #{tpu_custom_call.1} parent=1 // pred_check
      _
    $region23: #{tpu_custom_call.1} parent=1 // pred_check_branch
      %45 = sbr.rel (0) target = $region25
    $region24: #{tpu_custom_call.1} parent=1 // pred_region
      %46 = dma.done [#allocation4], 24576
    $region25: #{tpu_custom_call.1} parent=1 // pred_fallthru
      _
    // Predicated region
    $region26: #{tpu_custom_call.1} parent=1 // pred_check
      _
    $region27: #{tpu_custom_call.1} parent=1 // pred_check_branch
      %48 = sbr.rel (0) target = $region29
    $region28: #{tpu_custom_call.1} parent=1 // pred_region
      %49 = dma.done [#allocation7], 12288
    $region29: #{tpu_custom_call.1} parent=1 // pred_fallthru
      _
    %v50 = vld [vmem:[#allocation3] sm:$0xff]
    %v51 = vld [vmem:[#allocation3 + $0x8] sm:$0xff]
    %v52 = vld [vmem:[#allocation3 + $0x10] sm:$0xff]
    %v53 = vld [vmem:[#allocation3 + $0x18] sm:$0xff]
    %v54 = vld [vmem:[#allocation3 + $0x20] sm:$0xff]
    %v55 = vld [vmem:[#allocation3 + $0x28] sm:$0xff]
    %v56 = vld [vmem:[#allocation3 + $0x30] sm:$0xff]
    %v57 = vld [vmem:[#allocation3 + $0x38] sm:$0xff]
    %v58 = vld [vmem:[#allocation3 + $0x40] sm:$0xff]
    %v59 = vld [vmem:[#allocation3 + $0x48] sm:$0xff]
    %v60 = vld [vmem:[#allocation3 + $0x50] sm:$0xff]
    %v61 = vld [vmem:[#allocation3 + $0x58] sm:$0xff]
    %v62 = vld [vmem:[#allocation3 + $0x60] sm:$0xff]
    %v63 = vld [vmem:[#allocation3 + $0x68] sm:$0xff]
    %v64 = vld [vmem:[#allocation3 + $0x70] sm:$0xff]
    %v65 = vld [vmem:[#allocation3 + $0x78] sm:$0xff]
    %v66 = vld [vmem:[#allocation3 + $0x80] sm:$0xff]
    %v67 = vld [vmem:[#allocation3 + $0x88] sm:$0xff]
    %v68 = vld [vmem:[#allocation3 + $0x90] sm:$0xff]
    %v69 = vld [vmem:[#allocation3 + $0x98] sm:$0xff]
    %v70 = vld [vmem:[#allocation3 + $0xa0] sm:$0xff]
    %v71 = vld [vmem:[#allocation3 + $0xa8] sm:$0xff]
    %v72 = vld [vmem:[#allocation3 + $0xb0] sm:$0xff]
    %v73 = vld [vmem:[#allocation3 + $0xb8] sm:$0xff]
    %v74 = vld [vmem:[#allocation3 + $0xc0] sm:$0xff]
    %v75 = vld [vmem:[#allocation3 + $0xc8] sm:$0xff]
    %v76 = vld [vmem:[#allocation3 + $0xd0] sm:$0xff]
    %v77 = vld [vmem:[#allocation3 + $0xd8] sm:$0xff]
    %v78 = vld [vmem:[#allocation3 + $0xe0] sm:$0xff]
    %v79 = vld [vmem:[#allocation3 + $0xe8] sm:$0xff]
    %v80 = vld [vmem:[#allocation3 + $0xf0] sm:$0xff]
    %v81 = vld [vmem:[#allocation3 + $0xf8] sm:$0xff]
    %v82 = vld [vmem:[#allocation3 + $0x100] sm:$0xff]
    %v83 = vld [vmem:[#allocation3 + $0x108] sm:$0xff]
    %v84 = vld [vmem:[#allocation3 + $0x110] sm:$0xff]
    %v85 = vld [vmem:[#allocation3 + $0x118] sm:$0xff]
    %v86 = vld [vmem:[#allocation3 + $0x120] sm:$0xff]
    %v87 = vld [vmem:[#allocation3 + $0x128] sm:$0xff]
    %v88 = vld [vmem:[#allocation3 + $0x130] sm:$0xff]
    %v89 = vld [vmem:[#allocation3 + $0x138] sm:$0xff]
    %v90 = vld [vmem:[#allocation3 + $0x140] sm:$0xff]
    %v91 = vld [vmem:[#allocation3 + $0x148] sm:$0xff]
    %v92 = vld [vmem:[#allocation3 + $0x150] sm:$0xff]
    %v93 = vld [vmem:[#allocation3 + $0x158] sm:$0xff]
    %v94 = vld [vmem:[#allocation3 + $0x160] sm:$0xff]
    %v95 = vld [vmem:[#allocation3 + $0x168] sm:$0xff]
    %v96 = vld [vmem:[#allocation3 + $0x170] sm:$0xff]
    %v97 = vld [vmem:[#allocation3 + $0x178] sm:$0xff]
    %v98 = vld [vmem:[#allocation3 + $0x180] sm:$0xff]
    %v99 = vld [vmem:[#allocation3 + $0x188] sm:$0xff]
    %v100 = vld [vmem:[#allocation3 + $0x190] sm:$0xff]
    %v101 = vld [vmem:[#allocation3 + $0x198] sm:$0xff]
    %v102 = vld [vmem:[#allocation3 + $0x1a0] sm:$0xff]
    %v103 = vld [vmem:[#allocation3 + $0x1a8] sm:$0xff]
    %v104 = vld [vmem:[#allocation3 + $0x1b0] sm:$0xff]
    %v105 = vld [vmem:[#allocation3 + $0x1b8] sm:$0xff]
    %v106 = vld [vmem:[#allocation3 + $0x1c0] sm:$0xff]
    %v107 = vld [vmem:[#allocation3 + $0x1c8] sm:$0xff]
    %v108 = vld [vmem:[#allocation3 + $0x1d0] sm:$0xff]
    %v109 = vld [vmem:[#allocation3 + $0x1d8] sm:$0xff]
    %v110 = vld [vmem:[#allocation3 + $0x1e0] sm:$0xff]
    %v111 = vld [vmem:[#allocation3 + $0x1e8] sm:$0xff]
    %v112 = vld [vmem:[#allocation3 + $0x1f0] sm:$0xff]
    %v113 = vld [vmem:[#allocation3 + $0x1f8] sm:$0xff]
    %v114 = vld [vmem:[#allocation3 + $0x200] sm:$0xff]
    %v115 = vld [vmem:[#allocation3 + $0x208] sm:$0xff]
    %v116 = vld [vmem:[#allocation3 + $0x210] sm:$0xff]
    %v117 = vld [vmem:[#allocation3 + $0x218] sm:$0xff]
    %v118 = vld [vmem:[#allocation3 + $0x220] sm:$0xff]
    %v119 = vld [vmem:[#allocation3 + $0x228] sm:$0xff]
    %v120 = vld [vmem:[#allocation3 + $0x230] sm:$0xff]
    %v121 = vld [vmem:[#allocation3 + $0x238] sm:$0xff]
    %v122 = vld [vmem:[#allocation3 + $0x240] sm:$0xff]
    %v123 = vld [vmem:[#allocation3 + $0x248] sm:$0xff]
    %v124 = vld [vmem:[#allocation3 + $0x250] sm:$0xff]
    %v125 = vld [vmem:[#allocation3 + $0x258] sm:$0xff]
    %v126 = vld [vmem:[#allocation3 + $0x260] sm:$0xff]
    %v127 = vld [vmem:[#allocation3 + $0x268] sm:$0xff]
    %v128 = vld [vmem:[#allocation3 + $0x270] sm:$0xff]
    %v129 = vld [vmem:[#allocation3 + $0x278] sm:$0xff]
    %v130 = vld [vmem:[#allocation3 + $0x280] sm:$0xff]
    %v131 = vld [vmem:[#allocation3 + $0x288] sm:$0xff]
    %v132 = vld [vmem:[#allocation3 + $0x290] sm:$0xff]
    %v133 = vld [vmem:[#allocation3 + $0x298] sm:$0xff]
    %v134 = vld [vmem:[#allocation3 + $0x2a0] sm:$0xff]
    %v135 = vld [vmem:[#allocation3 + $0x2a8] sm:$0xff]
    %v136 = vld [vmem:[#allocation3 + $0x2b0] sm:$0xff]
    %v137 = vld [vmem:[#allocation3 + $0x2b8] sm:$0xff]
    %v138 = vld [vmem:[#allocation3 + $0x2c0] sm:$0xff]
    %v139 = vld [vmem:[#allocation3 + $0x2c8] sm:$0xff]
    %v140 = vld [vmem:[#allocation3 + $0x2d0] sm:$0xff]
    %v141 = vld [vmem:[#allocation3 + $0x2d8] sm:$0xff]
    %v142 = vld [vmem:[#allocation3 + $0x2e0] sm:$0xff]
    %v143 = vld [vmem:[#allocation3 + $0x2e8] sm:$0xff]
    %v144 = vld [vmem:[#allocation3 + $0x2f0] sm:$0xff]
    %v145 = vld [vmem:[#allocation3 + $0x2f8] sm:$0xff]
    %v146 = vld [vmem:[#allocation3 + $0x300] sm:$0xff]
    %v147 = vld [vmem:[#allocation3 + $0x308] sm:$0xff]
    %v148 = vld [vmem:[#allocation3 + $0x310] sm:$0xff]
    %v149 = vld [vmem:[#allocation3 + $0x318] sm:$0xff]
    %v150 = vld [vmem:[#allocation3 + $0x320] sm:$0xff]
    %v151 = vld [vmem:[#allocation3 + $0x328] sm:$0xff]
    %v152 = vld [vmem:[#allocation3 + $0x330] sm:$0xff]
    %v153 = vld [vmem:[#allocation3 + $0x338] sm:$0xff]
    %v154 = vld [vmem:[#allocation3 + $0x340] sm:$0xff]
    %v155 = vld [vmem:[#allocation3 + $0x348] sm:$0xff]
    %v156 = vld [vmem:[#allocation3 + $0x350] sm:$0xff]
    %v157 = vld [vmem:[#allocation3 + $0x358] sm:$0xff]
    %v158 = vld [vmem:[#allocation3 + $0x360] sm:$0xff]
    %v159 = vld [vmem:[#allocation3 + $0x368] sm:$0xff]
    %v160 = vld [vmem:[#allocation3 + $0x370] sm:$0xff]
    %v161 = vld [vmem:[#allocation3 + $0x378] sm:$0xff]
    %v162 = vld [vmem:[#allocation3 + $0x380] sm:$0xff]
    %v163 = vld [vmem:[#allocation3 + $0x388] sm:$0xff]
    %v164 = vld [vmem:[#allocation3 + $0x390] sm:$0xff]
    %v165 = vld [vmem:[#allocation3 + $0x398] sm:$0xff]
    %v166 = vld [vmem:[#allocation3 + $0x3a0] sm:$0xff]
    %v167 = vld [vmem:[#allocation3 + $0x3a8] sm:$0xff]
    %v168 = vld [vmem:[#allocation3 + $0x3b0] sm:$0xff]
    %v169 = vld [vmem:[#allocation3 + $0x3b8] sm:$0xff]
    %v170 = vld [vmem:[#allocation3 + $0x3c0] sm:$0xff]
    %v171 = vld [vmem:[#allocation3 + $0x3c8] sm:$0xff]
    %v172 = vld [vmem:[#allocation3 + $0x3d0] sm:$0xff]
    %v173 = vld [vmem:[#allocation3 + $0x3d8] sm:$0xff]
    %v174 = vld [vmem:[#allocation3 + $0x3e0] sm:$0xff]
    %v175 = vld [vmem:[#allocation3 + $0x3e8] sm:$0xff]
    %v176 = vld [vmem:[#allocation3 + $0x3f0] sm:$0xff]
    %v177 = vld [vmem:[#allocation3 + $0x3f8] sm:$0xff]
    %v178 = vld [vmem:[#allocation3 + $0x400] sm:$0xff]
    %v179 = vld [vmem:[#allocation3 + $0x408] sm:$0xff]
    %v180 = vld [vmem:[#allocation3 + $0x410] sm:$0xff]
    %v181 = vld [vmem:[#allocation3 + $0x418] sm:$0xff]
    %v182 = vld [vmem:[#allocation3 + $0x420] sm:$0xff]
    %v183 = vld [vmem:[#allocation3 + $0x428] sm:$0xff]
    %v184 = vld [vmem:[#allocation3 + $0x430] sm:$0xff]
    %v185 = vld [vmem:[#allocation3 + $0x438] sm:$0xff]
    %v186 = vld [vmem:[#allocation3 + $0x440] sm:$0xff]
    %v187 = vld [vmem:[#allocation3 + $0x448] sm:$0xff]
    %v188 = vld [vmem:[#allocation3 + $0x450] sm:$0xff]
    %v189 = vld [vmem:[#allocation3 + $0x458] sm:$0xff]
    %v190 = vld [vmem:[#allocation3 + $0x460] sm:$0xff]
    %v191 = vld [vmem:[#allocation3 + $0x468] sm:$0xff]
    %v192 = vld [vmem:[#allocation3 + $0x470] sm:$0xff]
    %v193 = vld [vmem:[#allocation3 + $0x478] sm:$0xff]
    %v194 = vld [vmem:[#allocation3 + $0x480] sm:$0xff]
    %v195 = vld [vmem:[#allocation3 + $0x488] sm:$0xff]
    %v196 = vld [vmem:[#allocation3 + $0x490] sm:$0xff]
    %v197 = vld [vmem:[#allocation3 + $0x498] sm:$0xff]
    %v198 = vld [vmem:[#allocation3 + $0x4a0] sm:$0xff]
    %v199 = vld [vmem:[#allocation3 + $0x4a8] sm:$0xff]
    %v200 = vld [vmem:[#allocation3 + $0x4b0] sm:$0xff]
    %v201 = vld [vmem:[#allocation3 + $0x4b8] sm:$0xff]
    %v202 = vld [vmem:[#allocation3 + $0x4c0] sm:$0xff]
    %v203 = vld [vmem:[#allocation3 + $0x4c8] sm:$0xff]
    %v204 = vld [vmem:[#allocation3 + $0x4d0] sm:$0xff]
    %v205 = vld [vmem:[#allocation3 + $0x4d8] sm:$0xff]
    %v206 = vld [vmem:[#allocation3 + $0x4e0] sm:$0xff]
    %v207 = vld [vmem:[#allocation3 + $0x4e8] sm:$0xff]
    %v208 = vld [vmem:[#allocation3 + $0x4f0] sm:$0xff]
    %v209 = vld [vmem:[#allocation3 + $0x4f8] sm:$0xff]
    %v210 = vld [vmem:[#allocation3 + $0x500] sm:$0xff]
    %v211 = vld [vmem:[#allocation3 + $0x508] sm:$0xff]
    %v212 = vld [vmem:[#allocation3 + $0x510] sm:$0xff]
    %v213 = vld [vmem:[#allocation3 + $0x518] sm:$0xff]
    %v214 = vld [vmem:[#allocation3 + $0x520] sm:$0xff]
    %v215 = vld [vmem:[#allocation3 + $0x528] sm:$0xff]
    %v216 = vld [vmem:[#allocation3 + $0x530] sm:$0xff]
    %v217 = vld [vmem:[#allocation3 + $0x538] sm:$0xff]
    %v218 = vld [vmem:[#allocation3 + $0x540] sm:$0xff]
    %v219 = vld [vmem:[#allocation3 + $0x548] sm:$0xff]
    %v220 = vld [vmem:[#allocation3 + $0x550] sm:$0xff]
    %v221 = vld [vmem:[#allocation3 + $0x558] sm:$0xff]
    %v222 = vld [vmem:[#allocation3 + $0x560] sm:$0xff]
    %v223 = vld [vmem:[#allocation3 + $0x568] sm:$0xff]
    %v224 = vld [vmem:[#allocation3 + $0x570] sm:$0xff]
    %v225 = vld [vmem:[#allocation3 + $0x578] sm:$0xff]
    %v226 = vld [vmem:[#allocation3 + $0x580] sm:$0xff]
    %v227 = vld [vmem:[#allocation3 + $0x588] sm:$0xff]
    %v228 = vld [vmem:[#allocation3 + $0x590] sm:$0xff]
    %v229 = vld [vmem:[#allocation3 + $0x598] sm:$0xff]
    %v230 = vld [vmem:[#allocation3 + $0x5a0] sm:$0xff]
    %v231 = vld [vmem:[#allocation3 + $0x5a8] sm:$0xff]
    %v232 = vld [vmem:[#allocation3 + $0x5b0] sm:$0xff]
    %v233 = vld [vmem:[#allocation3 + $0x5b8] sm:$0xff]
    %v234 = vld [vmem:[#allocation3 + $0x5c0] sm:$0xff]
    %v235 = vld [vmem:[#allocation3 + $0x5c8] sm:$0xff]
    %v236 = vld [vmem:[#allocation3 + $0x5d0] sm:$0xff]
    %v237 = vld [vmem:[#allocation3 + $0x5d8] sm:$0xff]
    %v238 = vld [vmem:[#allocation3 + $0x5e0] sm:$0xff]
    %v239 = vld [vmem:[#allocation3 + $0x5e8] sm:$0xff]
    %v240 = vld [vmem:[#allocation3 + $0x5f0] sm:$0xff]
    %v241 = vld [vmem:[#allocation3 + $0x5f8] sm:$0xff]
    %v242 = vld [vmem:[#allocation6] sm:$0xff]
    %v243 = vld [vmem:[#allocation6 + $0x8] sm:$0xff]
    %v244 = vld [vmem:[#allocation6 + $0x10] sm:$0xff]
    %v245 = vld [vmem:[#allocation6 + $0x18] sm:$0xff]
    %v246 = vld [vmem:[#allocation6 + $0x20] sm:$0xff]
    %v247 = vld [vmem:[#allocation6 + $0x28] sm:$0xff]
    %v248 = vld [vmem:[#allocation6 + $0x30] sm:$0xff]
    %v249 = vld [vmem:[#allocation6 + $0x38] sm:$0xff]
    %v250 = vld [vmem:[#allocation6 + $0x40] sm:$0xff]
    %v251 = vld [vmem:[#allocation6 + $0x48] sm:$0xff]
    %v252 = vld [vmem:[#allocation6 + $0x50] sm:$0xff]
    %v253 = vld [vmem:[#allocation6 + $0x58] sm:$0xff]
    %v254 = vld [vmem:[#allocation6 + $0x60] sm:$0xff]
    %v255 = vld [vmem:[#allocation6 + $0x68] sm:$0xff]
    %v256 = vld [vmem:[#allocation6 + $0x70] sm:$0xff]
    %v257 = vld [vmem:[#allocation6 + $0x78] sm:$0xff]
    %v258 = vld [vmem:[#allocation6 + $0x80] sm:$0xff]
    %v259 = vld [vmem:[#allocation6 + $0x88] sm:$0xff]
    %v260 = vld [vmem:[#allocation6 + $0x90] sm:$0xff]
    %v261 = vld [vmem:[#allocation6 + $0x98] sm:$0xff]
    %v262 = vld [vmem:[#allocation6 + $0xa0] sm:$0xff]
    %v263 = vld [vmem:[#allocation6 + $0xa8] sm:$0xff]
    %v264 = vld [vmem:[#allocation6 + $0xb0] sm:$0xff]
    %v265 = vld [vmem:[#allocation6 + $0xb8] sm:$0xff]
    %v266 = vld [vmem:[#allocation6 + $0xc0] sm:$0xff]
    %v267 = vld [vmem:[#allocation6 + $0xc8] sm:$0xff]
    %v268 = vld [vmem:[#allocation6 + $0xd0] sm:$0xff]
    %v269 = vld [vmem:[#allocation6 + $0xd8] sm:$0xff]
    %v270 = vld [vmem:[#allocation6 + $0xe0] sm:$0xff]
    %v271 = vld [vmem:[#allocation6 + $0xe8] sm:$0xff]
    %v272 = vld [vmem:[#allocation6 + $0xf0] sm:$0xff]
    %v273 = vld [vmem:[#allocation6 + $0xf8] sm:$0xff]
    %v274 = vld [vmem:[#allocation6 + $0x100] sm:$0xff]
    %v275 = vld [vmem:[#allocation6 + $0x108] sm:$0xff]
    %v276 = vld [vmem:[#allocation6 + $0x110] sm:$0xff]
    %v277 = vld [vmem:[#allocation6 + $0x118] sm:$0xff]
    %v278 = vld [vmem:[#allocation6 + $0x120] sm:$0xff]
    %v279 = vld [vmem:[#allocation6 + $0x128] sm:$0xff]
    %v280 = vld [vmem:[#allocation6 + $0x130] sm:$0xff]
    %v281 = vld [vmem:[#allocation6 + $0x138] sm:$0xff]
    %v282 = vld [vmem:[#allocation6 + $0x140] sm:$0xff]
    %v283 = vld [vmem:[#allocation6 + $0x148] sm:$0xff]
    %v284 = vld [vmem:[#allocation6 + $0x150] sm:$0xff]
    %v285 = vld [vmem:[#allocation6 + $0x158] sm:$0xff]
    %v286 = vld [vmem:[#allocation6 + $0x160] sm:$0xff]
    %v287 = vld [vmem:[#allocation6 + $0x168] sm:$0xff]
    %v288 = vld [vmem:[#allocation6 + $0x170] sm:$0xff]
    %v289 = vld [vmem:[#allocation6 + $0x178] sm:$0xff]
    %v290 = vld [vmem:[#allocation6 + $0x180] sm:$0xff]
    %v291 = vld [vmem:[#allocation6 + $0x188] sm:$0xff]
    %v292 = vld [vmem:[#allocation6 + $0x190] sm:$0xff]
    %v293 = vld [vmem:[#allocation6 + $0x198] sm:$0xff]
    %v294 = vld [vmem:[#allocation6 + $0x1a0] sm:$0xff]
    %v295 = vld [vmem:[#allocation6 + $0x1a8] sm:$0xff]
    %v296 = vld [vmem:[#allocation6 + $0x1b0] sm:$0xff]
    %v297 = vld [vmem:[#allocation6 + $0x1b8] sm:$0xff]
    %v298 = vld [vmem:[#allocation6 + $0x1c0] sm:$0xff]
    %v299 = vld [vmem:[#allocation6 + $0x1c8] sm:$0xff]
    %v300 = vld [vmem:[#allocation6 + $0x1d0] sm:$0xff]
    %v301 = vld [vmem:[#allocation6 + $0x1d8] sm:$0xff]
    %v302 = vld [vmem:[#allocation6 + $0x1e0] sm:$0xff]
    %v303 = vld [vmem:[#allocation6 + $0x1e8] sm:$0xff]
    %v304 = vld [vmem:[#allocation6 + $0x1f0] sm:$0xff]
    %v305 = vld [vmem:[#allocation6 + $0x1f8] sm:$0xff]
    %v306 = vld [vmem:[#allocation6 + $0x200] sm:$0xff]
    %v307 = vld [vmem:[#allocation6 + $0x208] sm:$0xff]
    %v308 = vld [vmem:[#allocation6 + $0x210] sm:$0xff]
    %v309 = vld [vmem:[#allocation6 + $0x218] sm:$0xff]
    %v310 = vld [vmem:[#allocation6 + $0x220] sm:$0xff]
    %v311 = vld [vmem:[#allocation6 + $0x228] sm:$0xff]
    %v312 = vld [vmem:[#allocation6 + $0x230] sm:$0xff]
    %v313 = vld [vmem:[#allocation6 + $0x238] sm:$0xff]
    %v314 = vld [vmem:[#allocation6 + $0x240] sm:$0xff]
    %v315 = vld [vmem:[#allocation6 + $0x248] sm:$0xff]
    %v316 = vld [vmem:[#allocation6 + $0x250] sm:$0xff]
    %v317 = vld [vmem:[#allocation6 + $0x258] sm:$0xff]
    %v318 = vld [vmem:[#allocation6 + $0x260] sm:$0xff]
    %v319 = vld [vmem:[#allocation6 + $0x268] sm:$0xff]
    %v320 = vld [vmem:[#allocation6 + $0x270] sm:$0xff]
    %v321 = vld [vmem:[#allocation6 + $0x278] sm:$0xff]
    %v322 = vld [vmem:[#allocation6 + $0x280] sm:$0xff]
    %v323 = vld [vmem:[#allocation6 + $0x288] sm:$0xff]
    %v324 = vld [vmem:[#allocation6 + $0x290] sm:$0xff]
    %v325 = vld [vmem:[#allocation6 + $0x298] sm:$0xff]
    %v326 = vld [vmem:[#allocation6 + $0x2a0] sm:$0xff]
    %v327 = vld [vmem:[#allocation6 + $0x2a8] sm:$0xff]
    %v328 = vld [vmem:[#allocation6 + $0x2b0] sm:$0xff]
    %v329 = vld [vmem:[#allocation6 + $0x2b8] sm:$0xff]
    %v330 = vld [vmem:[#allocation6 + $0x2c0] sm:$0xff]
    %v331 = vld [vmem:[#allocation6 + $0x2c8] sm:$0xff]
    %v332 = vld [vmem:[#allocation6 + $0x2d0] sm:$0xff]
    %v333 = vld [vmem:[#allocation6 + $0x2d8] sm:$0xff]
    %v334 = vld [vmem:[#allocation6 + $0x2e0] sm:$0xff]
    %v335 = vld [vmem:[#allocation6 + $0x2e8] sm:$0xff]
    %v336 = vld [vmem:[#allocation6 + $0x2f0] sm:$0xff]
    %v337 = vld [vmem:[#allocation6 + $0x2f8] sm:$0xff]
    %v338 = vld [vmem:[%s2] sm:$0x1]
    %v340 = vlaneseq
    %v341 = vshrl.u32 %v340, 7
    %v342 = vsub.s32 0, %v341
    %v343 = vrot.slane %v338, %v342
    %345 = vmatprep.subr.mxu0 0.0
    %346 = vmatpush1.msra.mxu0 %v242
    %347 = vmatprep.subr.mxu0 0.0
    %348 = vmatpush1.msra.mxu0 %v243
    %349 = vmatprep.subr.mxu0 0.0
    %350 = vmatpush1.msra.mxu0 %v244
    %351 = vmatprep.subr.mxu0 0.0
    %352 = vmatpush1.msra.mxu0 %v245
    %353 = vmatprep.subr.mxu0 0.0
    %354 = vmatpush1.msra.mxu0 %v246
    %355 = vmatprep.subr.mxu0 0.0
    %356 = vmatpush1.msra.mxu0 %v247
    %357 = vmatprep.subr.mxu0 0.0
    %358 = vmatpush1.msra.mxu0 %v248
    %359 = vmatprep.subr.mxu0 0.0
    %360 = vmatpush1.msra.mxu0 %v249
    %361 = vmatprep.subr.mxu0 0.0
    %362 = vmatpush1.msra.mxu0 %v250
    %363 = vmatprep.subr.mxu0 0.0
    %364 = vmatpush1.msra.mxu0 %v251
    %365 = vmatprep.subr.mxu0 0.0
    %366 = vmatpush1.msra.mxu0 %v252
    %367 = vmatprep.subr.mxu0 0.0
    %368 = vmatpush1.msra.mxu0 %v253
    %369 = vmatprep.subr.mxu0 0.0
    %370 = vmatpush1.msra.mxu0 %v254
    %371 = vmatprep.subr.mxu0 0.0
    %372 = vmatpush1.msra.mxu0 %v255
    %373 = vmatprep.subr.mxu0 0.0
    %374 = vmatpush1.msra.mxu0 %v256
    %375 = vmatprep.subr.mxu0 0.0
    %376 = vmatpush1.msra.mxu0 %v257
    %377 = vmatprep.subr.mxu0 0.0
    %378 = vmatpush1.msra.mxu0 %v258
    %379 = vmatprep.subr.mxu0 0.0
    %380 = vmatpush1.msra.mxu0 %v259
    %381 = vmatprep.subr.mxu0 0.0
    %382 = vmatpush1.msra.mxu0 %v260
    %383 = vmatprep.subr.mxu0 0.0
    %384 = vmatpush1.msra.mxu0 %v261
    %385 = vmatprep.subr.mxu0 0.0
    %386 = vmatpush1.msra.mxu0 %v262
    %387 = vmatprep.subr.mxu0 0.0
    %388 = vmatpush1.msra.mxu0 %v263
    %389 = vmatprep.subr.mxu0 0.0
    %390 = vmatpush1.msra.mxu0 %v264
    %391 = vmatprep.subr.mxu0 0.0
    %392 = vmatpush1.msra.mxu0 %v265
    %393 = vmatprep.subr.mxu0 0.0
    %394 = vmatpush1.msra.mxu0 %v266
    %395 = vmatprep.subr.mxu0 0.0
    %396 = vmatpush1.msra.mxu0 %v267
    %397 = vmatprep.subr.mxu0 0.0
    %398 = vmatpush1.msra.mxu0 %v268
    %399 = vmatprep.subr.mxu0 0.0
    %400 = vmatpush1.msra.mxu0 %v269
    %401 = vmatprep.subr.mxu0 0.0
    %402 = vmatpush1.msra.mxu0 %v270
    %403 = vmatprep.subr.mxu0 0.0
    %404 = vmatpush1.msra.mxu0 %v271
    %405 = vmatprep.subr.mxu0 0.0
    %406 = vmatpush1.msra.mxu0 %v272
    %407 = vmatprep.subr.mxu0 0.0
    %408 = vmatpush1.msra.mxu0 %v273
    %409 = vmatprep.mubr.f32.mxu0 %v51
    %410 = vmatmul.mubr.f32.gmra.mrb[0].mxu0 %v50
    %v411 = vpop.f32.mrb[0].mxu0
    %v412 = vadd.f32 %v343, %v411
    %v413 = vpop.f32.mrb[0].mxu0
    %414 = vmatprep.mubr.f32.mxu0 %v57
    %415 = vmatmul.mubr.f32.gmra.mrb[0].mxu0 %v56
    %v416 = vpop.f32.mrb[0].mxu0
    %v417 = vadd.f32 %v343, %v416
    %v418 = vpop.f32.mrb[0].mxu0
    %419 = vmatprep.mubr.f32.mxu0 %v63
    %420 = vmatmul.mubr.f32.gmra.mrb[0].mxu0 %v62
    %v421 = vpop.f32.mrb[0].mxu0
    %v422 = vadd.f32 %v343, %v421
    %v423 = vpop.f32.mrb[0].mxu0
    %424 = vmatprep.mubr.f32.mxu0 %v69
    %425 = vmatmul.mubr.f32.gmra.mrb[0].mxu0 %v68
    %v426 = vpop.f32.mrb[0].mxu0
    %v427 = vadd.f32 %v343, %v426
    %v428 = vpop.f32.mrb[0].mxu0
    %429 = vmatprep.mubr.f32.mxu0 %v75
    %430 = vmatmul.mubr.f32.gmra.mrb[0].mxu0 %v74
    %v431 = vpop.f32.mrb[0].mxu0
    %v432 = vadd.f32 %v343, %v431
    %v433 = vpop.f32.mrb[0].mxu0
    %434 = vmatprep.mubr.f32.mxu0 %v81
    %435 = vmatmul.mubr.f32.gmra.mrb[0].mxu0 %v80
    %v436 = vpop.f32.mrb[0].mxu0
    %v437 = vadd.f32 %v343, %v436
    %v438 = vpop.f32.mrb[0].mxu0
    %439 = vmatprep.mubr.f32.mxu0 %v87
    %440 = vmatmul.mubr.f32.gmra.mrb[0].mxu0 %v86
    %v441 = vpop.f32.mrb[0].mxu0
    %v442 = vadd.f32 %v343, %v441
    %v443 = vpop.f32.mrb[0].mxu0
    %444 = vmatprep.mubr.f32.mxu0 %v93
    %445 = vmatmul.mubr.f32.gmra.mrb[0].mxu0 %v92
    %v446 = vpop.f32.mrb[0].mxu0
    %v447 = vadd.f32 %v343, %v446
    %v448 = vpop.f32.mrb[0].mxu0
    %449 = vmatprep.mubr.f32.mxu0 %v99
    %450 = vmatmul.mubr.f32.gmra.mrb[0].mxu0 %v98
    %v451 = vpop.f32.mrb[0].mxu0
    %v452 = vadd.f32 %v343, %v451
    %v453 = vpop.f32.mrb[0].mxu0
    %454 = vmatprep.mubr.f32.mxu0 %v105
    %455 = vmatmul.mubr.f32.gmra.mrb[0].mxu0 %v104
    %v456 = vpop.f32.mrb[0].mxu0
    %v457 = vadd.f32 %v343, %v456
    %v458 = vpop.f32.mrb[0].mxu0
    %459 = vmatprep.mubr.f32.mxu0 %v111
    %460 = vmatmul.mubr.f32.gmra.mrb[0].mxu0 %v110
    %v461 = vpop.f32.mrb[0].mxu0
    %v462 = vadd.f32 %v343, %v461
    %v463 = vpop.f32.mrb[0].mxu0
    %464 = vmatprep.mubr.f32.mxu0 %v117
    %465 = vmatmul.mubr.f32.gmra.mrb[0].mxu0 %v116
    %v466 = vpop.f32.mrb[0].mxu0
    %v467 = vadd.f32 %v343, %v466
    %v468 = vpop.f32.mrb[0].mxu0
    %469 = vmatprep.mubr.f32.mxu0 %v123
    %470 = vmatmul.mubr.f32.gmra.mrb[0].mxu0 %v122
    %v471 = vpop.f32.mrb[0].mxu0
    %v472 = vadd.f32 %v343, %v471
    %v473 = vpop.f32.mrb[0].mxu0
    %474 = vmatprep.mubr.f32.mxu0 %v129
    %475 = vmatmul.mubr.f32.gmra.mrb[0].mxu0 %v128
    %v476 = vpop.f32.mrb[0].mxu0
    %v477 = vadd.f32 %v343, %v476
    %v478 = vpop.f32.mrb[0].mxu0
    %479 = vmatprep.mubr.f32.mxu0 %v135
    %480 = vmatmul.mubr.f32.gmra.mrb[0].mxu0 %v134
    %v481 = vpop.f32.mrb[0].mxu0
    %v482 = vadd.f32 %v343, %v481
    %v483 = vpop.f32.mrb[0].mxu0
    %484 = vmatprep.mubr.f32.mxu0 %v141
    %485 = vmatmul.mubr.f32.gmra.mrb[0].mxu0 %v140
    %v486 = vpop.f32.mrb[0].mxu0
    %v487 = vadd.f32 %v343, %v486
    %v488 = vpop.f32.mrb[0].mxu0
    %489 = vmatprep.mubr.f32.mxu0 %v147
    %490 = vmatmul.mubr.f32.gmra.mrb[0].mxu0 %v146
    %v491 = vpop.f32.mrb[0].mxu0
    %v492 = vadd.f32 %v343, %v491
    %v493 = vpop.f32.mrb[0].mxu0
    %494 = vmatprep.mubr.f32.mxu0 %v153
    %495 = vmatmul.mubr.f32.gmra.mrb[0].mxu0 %v152
    %v496 = vpop.f32.mrb[0].mxu0
    %v497 = vadd.f32 %v343, %v496
    %v498 = vpop.f32.mrb[0].mxu0
    %499 = vmatprep.mubr.f32.mxu0 %v159
    %500 = vmatmul.mubr.f32.gmra.mrb[0].mxu0 %v158
    %v501 = vpop.f32.mrb[0].mxu0
    %v502 = vadd.f32 %v343, %v501
    %v503 = vpop.f32.mrb[0].mxu0
    %504 = vmatprep.mubr.f32.mxu0 %v165
    %505 = vmatmul.mubr.f32.gmra.mrb[0].mxu0 %v164
    %v506 = vpop.f32.mrb[0].mxu0
    %v507 = vadd.f32 %v343, %v506
    %v508 = vpop.f32.mrb[0].mxu0
    %509 = vmatprep.mubr.f32.mxu0 %v171
    %510 = vmatmul.mubr.f32.gmra.mrb[0].mxu0 %v170
    %v511 = vpop.f32.mrb[0].mxu0
    %v512 = vadd.f32 %v343, %v511
    %v513 = vpop.f32.mrb[0].mxu0
    %514 = vmatprep.mubr.f32.mxu0 %v177
    %515 = vmatmul.mubr.f32.gmra.mrb[0].mxu0 %v176
    %v516 = vpop.f32.mrb[0].mxu0
    %v517 = vadd.f32 %v343, %v516
    %v518 = vpop.f32.mrb[0].mxu0
    %519 = vmatprep.mubr.f32.mxu0 %v183
    %520 = vmatmul.mubr.f32.gmra.mrb[0].mxu0 %v182
    %v521 = vpop.f32.mrb[0].mxu0
    %v522 = vadd.f32 %v343, %v521
    %v523 = vpop.f32.mrb[0].mxu0
    %524 = vmatprep.mubr.f32.mxu0 %v189
    %525 = vmatmul.mubr.f32.gmra.mrb[0].mxu0 %v188
    %v526 = vpop.f32.mrb[0].mxu0
    %v527 = vadd.f32 %v343, %v526
    %v528 = vpop.f32.mrb[0].mxu0
    %529 = vmatprep.mubr.f32.mxu0 %v195
    %530 = vmatmul.mubr.f32.gmra.mrb[0].mxu0 %v194
    %v531 = vpop.f32.mrb[0].mxu0
    %v532 = vadd.f32 %v343, %v531
    %v533 = vpop.f32.mrb[0].mxu0
    %534 = vmatprep.mubr.f32.mxu0 %v201
    %535 = vmatmul.mubr.f32.gmra.mrb[0].mxu0 %v200
    %v536 = vpop.f32.mrb[0].mxu0
    %v537 = vadd.f32 %v343, %v536
    %v538 = vpop.f32.mrb[0].mxu0
    %539 = vmatprep.mubr.f32.mxu0 %v207
    %540 = vmatmul.mubr.f32.gmra.mrb[0].mxu0 %v206
    %v541 = vpop.f32.mrb[0].mxu0
    %v542 = vadd.f32 %v343, %v541
    %v543 = vpop.f32.mrb[0].mxu0
    %544 = vmatprep.mubr.f32.mxu0 %v213
    %545 = vmatmul.mubr.f32.gmra.mrb[0].mxu0 %v212
    %v546 = vpop.f32.mrb[0].mxu0
    %v547 = vadd.f32 %v343, %v546
    %v548 = vpop.f32.mrb[0].mxu0
    %549 = vmatprep.mubr.f32.mxu0 %v219
    %550 = vmatmul.mubr.f32.gmra.mrb[0].mxu0 %v218
    %v551 = vpop.f32.mrb[0].mxu0
    %v552 = vadd.f32 %v343, %v551
    %v553 = vpop.f32.mrb[0].mxu0
    %554 = vmatprep.mubr.f32.mxu0 %v225
    %555 = vmatmul.mubr.f32.gmra.mrb[0].mxu0 %v224
    %v556 = vpop.f32.mrb[0].mxu0
    %v557 = vadd.f32 %v343, %v556
    %v558 = vpop.f32.mrb[0].mxu0
    %559 = vmatprep.mubr.f32.mxu0 %v231
    %560 = vmatmul.mubr.f32.gmra.mrb[0].mxu0 %v230
    %v561 = vpop.f32.mrb[0].mxu0
    %v562 = vadd.f32 %v343, %v561
    %v563 = vpop.f32.mrb[0].mxu0
    %564 = vmatprep.mubr.f32.mxu0 %v237
    %565 = vmatmul.mubr.f32.gmra.mrb[0].mxu0 %v236
    %v566 = vpop.f32.mrb[0].mxu0
    %v567 = vadd.f32 %v343, %v566
    %v568 = vpop.f32.mrb[0].mxu0
    %569 = vdwg.mxu0
    %570 = vmatprep.subr.mxu0 0.0
    %571 = vmatpush1.msra.mxu0 %v274
    %572 = vmatprep.subr.mxu0 0.0
    %573 = vmatpush1.msra.mxu0 %v275
    %574 = vmatprep.subr.mxu0 0.0
    %575 = vmatpush1.msra.mxu0 %v276
    %576 = vmatprep.subr.mxu0 0.0
    %577 = vmatpush1.msra.mxu0 %v277
    %578 = vmatprep.subr.mxu0 0.0
    %579 = vmatpush1.msra.mxu0 %v278
    %580 = vmatprep.subr.mxu0 0.0
    %581 = vmatpush1.msra.mxu0 %v279
    %582 = vmatprep.subr.mxu0 0.0
    %583 = vmatpush1.msra.mxu0 %v280
    %584 = vmatprep.subr.mxu0 0.0
    %585 = vmatpush1.msra.mxu0 %v281
    %586 = vmatprep.subr.mxu0 0.0
    %587 = vmatpush1.msra.mxu0 %v282
    %588 = vmatprep.subr.mxu0 0.0
    %589 = vmatpush1.msra.mxu0 %v283
    %590 = vmatprep.subr.mxu0 0.0
    %591 = vmatpush1.msra.mxu0 %v284
    %592 = vmatprep.subr.mxu0 0.0
    %593 = vmatpush1.msra.mxu0 %v285
    %594 = vmatprep.subr.mxu0 0.0
    %595 = vmatpush1.msra.mxu0 %v286
    %596 = vmatprep.subr.mxu0 0.0
    %597 = vmatpush1.msra.mxu0 %v287
    %598 = vmatprep.subr.mxu0 0.0
    %599 = vmatpush1.msra.mxu0 %v288
    %600 = vmatprep.subr.mxu0 0.0
    %601 = vmatpush1.msra.mxu0 %v289
    %602 = vmatprep.subr.mxu0 0.0
    %603 = vmatpush1.msra.mxu0 %v290
    %604 = vmatprep.subr.mxu0 0.0
    %605 = vmatpush1.msra.mxu0 %v291
    %606 = vmatprep.subr.mxu0 0.0
    %607 = vmatpush1.msra.mxu0 %v292
    %608 = vmatprep.subr.mxu0 0.0
    %609 = vmatpush1.msra.mxu0 %v293
    %610 = vmatprep.subr.mxu0 0.0
    %611 = vmatpush1.msra.mxu0 %v294
    %612 = vmatprep.subr.mxu0 0.0
    %613 = vmatpush1.msra.mxu0 %v295
    %614 = vmatprep.subr.mxu0 0.0
    %615 = vmatpush1.msra.mxu0 %v296
    %616 = vmatprep.subr.mxu0 0.0
    %617 = vmatpush1.msra.mxu0 %v297
    %618 = vmatprep.subr.mxu0 0.0
    %619 = vmatpush1.msra.mxu0 %v298
    %620 = vmatprep.subr.mxu0 0.0
    %621 = vmatpush1.msra.mxu0 %v299
    %622 = vmatprep.subr.mxu0 0.0
    %623 = vmatpush1.msra.mxu0 %v300
    %624 = vmatprep.subr.mxu0 0.0
    %625 = vmatpush1.msra.mxu0 %v301
    %626 = vmatprep.subr.mxu0 0.0
    %627 = vmatpush1.msra.mxu0 %v302
    %628 = vmatprep.subr.mxu0 0.0
    %629 = vmatpush1.msra.mxu0 %v303
    %630 = vmatprep.subr.mxu0 0.0
    %631 = vmatpush1.msra.mxu0 %v304
    %632 = vmatprep.subr.mxu0 0.0
    %633 = vmatpush1.msra.mxu0 %v305
    %634 = vmatprep.mubr.f32.mxu0 %v53
    %635 = vmatmul.mubr.f32.gmra.mrb[0].mxu0 %v52
    %v636 = vpop.f32.mrb[0].mxu0
    %v637 = vadd.f32 %v412, %v636
    %v638 = vpop.f32.mrb[0].mxu0
    %639 = vmatprep.mubr.f32.mxu0 %v59
    %640 = vmatmul.mubr.f32.gmra.mrb[0].mxu0 %v58
    %v641 = vpop.f32.mrb[0].mxu0
    %v642 = vadd.f32 %v417, %v641
    %v643 = vpop.f32.mrb[0].mxu0
    %644 = vmatprep.mubr.f32.mxu0 %v65
    %645 = vmatmul.mubr.f32.gmra.mrb[0].mxu0 %v64
    %v646 = vpop.f32.mrb[0].mxu0
    %v647 = vadd.f32 %v422, %v646
    %v648 = vpop.f32.mrb[0].mxu0
    %649 = vmatprep.mubr.f32.mxu0 %v71
    %650 = vmatmul.mubr.f32.gmra.mrb[0].mxu0 %v70
    %v651 = vpop.f32.mrb[0].mxu0
    %v652 = vadd.f32 %v427, %v651
    %v653 = vpop.f32.mrb[0].mxu0
    %654 = vmatprep.mubr.f32.mxu0 %v77
    %655 = vmatmul.mubr.f32.gmra.mrb[0].mxu0 %v76
    %v656 = vpop.f32.mrb[0].mxu0
    %v657 = vadd.f32 %v432, %v656
    %v658 = vpop.f32.mrb[0].mxu0
    %659 = vmatprep.mubr.f32.mxu0 %v83
    %660 = vmatmul.mubr.f32.gmra.mrb[0].mxu0 %v82
    %v661 = vpop.f32.mrb[0].mxu0
    %v662 = vadd.f32 %v437, %v661
    %v663 = vpop.f32.mrb[0].mxu0
    %664 = vmatprep.mubr.f32.mxu0 %v89
    %665 = vmatmul.mubr.f32.gmra.mrb[0].mxu0 %v88
    %v666 = vpop.f32.mrb[0].mxu0
    %v667 = vadd.f32 %v442, %v666
    %v668 = vpop.f32.mrb[0].mxu0
    %669 = vmatprep.mubr.f32.mxu0 %v95
    %670 = vmatmul.mubr.f32.gmra.mrb[0].mxu0 %v94
    %v671 = vpop.f32.mrb[0].mxu0
    %v672 = vadd.f32 %v447, %v671
    %v673 = vpop.f32.mrb[0].mxu0
    %674 = vmatprep.mubr.f32.mxu0 %v101
    %675 = vmatmul.mubr.f32.gmra.mrb[0].mxu0 %v100
    %v676 = vpop.f32.mrb[0].mxu0
    %v677 = vadd.f32 %v452, %v676
    %v678 = vpop.f32.mrb[0].mxu0
    %679 = vmatprep.mubr.f32.mxu0 %v107
    %680 = vmatmul.mubr.f32.gmra.mrb[0].mxu0 %v106
    %v681 = vpop.f32.mrb[0].mxu0
    %v682 = vadd.f32 %v457, %v681
    %v683 = vpop.f32.mrb[0].mxu0
    %684 = vmatprep.mubr.f32.mxu0 %v113
    %685 = vmatmul.mubr.f32.gmra.mrb[0].mxu0 %v112
    %v686 = vpop.f32.mrb[0].mxu0
    %v687 = vadd.f32 %v462, %v686
    %v688 = vpop.f32.mrb[0].mxu0
    %689 = vmatprep.mubr.f32.mxu0 %v119
    %690 = vmatmul.mubr.f32.gmra.mrb[0].mxu0 %v118
    %v691 = vpop.f32.mrb[0].mxu0
    %v692 = vadd.f32 %v467, %v691
    %v693 = vpop.f32.mrb[0].mxu0
    %694 = vmatprep.mubr.f32.mxu0 %v125
    %695 = vmatmul.mubr.f32.gmra.mrb[0].mxu0 %v124
    %v696 = vpop.f32.mrb[0].mxu0
    %v697 = vadd.f32 %v472, %v696
    %v698 = vpop.f32.mrb[0].mxu0
    %699 = vmatprep.mubr.f32.mxu0 %v131
    %700 = vmatmul.mubr.f32.gmra.mrb[0].mxu0 %v130
    %v701 = vpop.f32.mrb[0].mxu0
    %v702 = vadd.f32 %v477, %v701
    %v703 = vpop.f32.mrb[0].mxu0
    %704 = vmatprep.mubr.f32.mxu0 %v137
    %705 = vmatmul.mubr.f32.gmra.mrb[0].mxu0 %v136
    %v706 = vpop.f32.mrb[0].mxu0
    %v707 = vadd.f32 %v482, %v706
    %v708 = vpop.f32.mrb[0].mxu0
    %709 = vmatprep.mubr.f32.mxu0 %v143
    %710 = vmatmul.mubr.f32.gmra.mrb[0].mxu0 %v142
    %v711 = vpop.f32.mrb[0].mxu0
    %v712 = vadd.f32 %v487, %v711
    %v713 = vpop.f32.mrb[0].mxu0
    %714 = vmatprep.mubr.f32.mxu0 %v149
    %715 = vmatmul.mubr.f32.gmra.mrb[0].mxu0 %v148
    %v716 = vpop.f32.mrb[0].mxu0
    %v717 = vadd.f32 %v492, %v716
    %v718 = vpop.f32.mrb[0].mxu0
    %719 = vmatprep.mubr.f32.mxu0 %v155
    %720 = vmatmul.mubr.f32.gmra.mrb[0].mxu0 %v154
    %v721 = vpop.f32.mrb[0].mxu0
    %v722 = vadd.f32 %v497, %v721
    %v723 = vpop.f32.mrb[0].mxu0
    %724 = vmatprep.mubr.f32.mxu0 %v161
    %725 = vmatmul.mubr.f32.gmra.mrb[0].mxu0 %v160
    %v726 = vpop.f32.mrb[0].mxu0
    %v727 = vadd.f32 %v502, %v726
    %v728 = vpop.f32.mrb[0].mxu0
    %729 = vmatprep.mubr.f32.mxu0 %v167
    %730 = vmatmul.mubr.f32.gmra.mrb[0].mxu0 %v166
    %v731 = vpop.f32.mrb[0].mxu0
    %v732 = vadd.f32 %v507, %v731
    %v733 = vpop.f32.mrb[0].mxu0
    %734 = vmatprep.mubr.f32.mxu0 %v173
    %735 = vmatmul.mubr.f32.gmra.mrb[0].mxu0 %v172
    %v736 = vpop.f32.mrb[0].mxu0
    %v737 = vadd.f32 %v512, %v736
    %v738 = vpop.f32.mrb[0].mxu0
    %739 = vmatprep.mubr.f32.mxu0 %v179
    %740 = vmatmul.mubr.f32.gmra.mrb[0].mxu0 %v178
    %v741 = vpop.f32.mrb[0].mxu0
    %v742 = vadd.f32 %v517, %v741
    %v743 = vpop.f32.mrb[0].mxu0
    %744 = vmatprep.mubr.f32.mxu0 %v185
    %745 = vmatmul.mubr.f32.gmra.mrb[0].mxu0 %v184
    %v746 = vpop.f32.mrb[0].mxu0
    %v747 = vadd.f32 %v522, %v746
    %v748 = vpop.f32.mrb[0].mxu0
    %749 = vmatprep.mubr.f32.mxu0 %v191
    %750 = vmatmul.mubr.f32.gmra.mrb[0].mxu0 %v190
    %v751 = vpop.f32.mrb[0].mxu0
    %v752 = vadd.f32 %v527, %v751
    %v753 = vpop.f32.mrb[0].mxu0
    %754 = vmatprep.mubr.f32.mxu0 %v197
    %755 = vmatmul.mubr.f32.gmra.mrb[0].mxu0 %v196
    %v756 = vpop.f32.mrb[0].mxu0
    %v757 = vadd.f32 %v532, %v756
    %v758 = vpop.f32.mrb[0].mxu0
    %759 = vmatprep.mubr.f32.mxu0 %v203
    %760 = vmatmul.mubr.f32.gmra.mrb[0].mxu0 %v202
    %v761 = vpop.f32.mrb[0].mxu0
    %v762 = vadd.f32 %v537, %v761
    %v763 = vpop.f32.mrb[0].mxu0
    %764 = vmatprep.mubr.f32.mxu0 %v209
    %765 = vmatmul.mubr.f32.gmra.mrb[0].mxu0 %v208
    %v766 = vpop.f32.mrb[0].mxu0
    %v767 = vadd.f32 %v542, %v766
    %v768 = vpop.f32.mrb[0].mxu0
    %769 = vmatprep.mubr.f32.mxu0 %v215
    %770 = vmatmul.mubr.f32.gmra.mrb[0].mxu0 %v214
    %v771 = vpop.f32.mrb[0].mxu0
    %v772 = vadd.f32 %v547, %v771
    %v773 = vpop.f32.mrb[0].mxu0
    %774 = vmatprep.mubr.f32.mxu0 %v221
    %775 = vmatmul.mubr.f32.gmra.mrb[0].mxu0 %v220
    %v776 = vpop.f32.mrb[0].mxu0
    %v777 = vadd.f32 %v552, %v776
    %v778 = vpop.f32.mrb[0].mxu0
    %779 = vmatprep.mubr.f32.mxu0 %v227
    %780 = vmatmul.mubr.f32.gmra.mrb[0].mxu0 %v226
    %v781 = vpop.f32.mrb[0].mxu0
    %v782 = vadd.f32 %v557, %v781
    %v783 = vpop.f32.mrb[0].mxu0
    %784 = vmatprep.mubr.f32.mxu0 %v233
    %785 = vmatmul.mubr.f32.gmra.mrb[0].mxu0 %v232
    %v786 = vpop.f32.mrb[0].mxu0
    %v787 = vadd.f32 %v562, %v786
    %v788 = vpop.f32.mrb[0].mxu0
    %789 = vmatprep.mubr.f32.mxu0 %v239
    %790 = vmatmul.mubr.f32.gmra.mrb[0].mxu0 %v238
    %v791 = vpop.f32.mrb[0].mxu0
    %v792 = vadd.f32 %v567, %v791
    %v793 = vpop.f32.mrb[0].mxu0
    %794 = vdwg.mxu0
    %795 = vmatprep.subr.mxu0 0.0
    %796 = vmatpush1.msra.mxu0 %v306
    %797 = vmatprep.subr.mxu0 0.0
    %798 = vmatpush1.msra.mxu0 %v307
    %799 = vmatprep.subr.mxu0 0.0
    %800 = vmatpush1.msra.mxu0 %v308
    %801 = vmatprep.subr.mxu0 0.0
    %802 = vmatpush1.msra.mxu0 %v309
    %803 = vmatprep.subr.mxu0 0.0
    %804 = vmatpush1.msra.mxu0 %v310
    %805 = vmatprep.subr.mxu0 0.0
    %806 = vmatpush1.msra.mxu0 %v311
    %807 = vmatprep.subr.mxu0 0.0
    %808 = vmatpush1.msra.mxu0 %v312
    %809 = vmatprep.subr.mxu0 0.0
    %810 = vmatpush1.msra.mxu0 %v313
    %811 = vmatprep.subr.mxu0 0.0
    %812 = vmatpush1.msra.mxu0 %v314
    %813 = vmatprep.subr.mxu0 0.0
    %814 = vmatpush1.msra.mxu0 %v315
    %815 = vmatprep.subr.mxu0 0.0
    %816 = vmatpush1.msra.mxu0 %v316
    %817 = vmatprep.subr.mxu0 0.0
    %818 = vmatpush1.msra.mxu0 %v317
    %819 = vmatprep.subr.mxu0 0.0
    %820 = vmatpush1.msra.mxu0 %v318
    %821 = vmatprep.subr.mxu0 0.0
    %822 = vmatpush1.msra.mxu0 %v319
    %823 = vmatprep.subr.mxu0 0.0
    %824 = vmatpush1.msra.mxu0 %v320
    %825 = vmatprep.subr.mxu0 0.0
    %826 = vmatpush1.msra.mxu0 %v321
    %827 = vmatprep.subr.mxu0 0.0
    %828 = vmatpush1.msra.mxu0 %v322
    %829 = vmatprep.subr.mxu0 0.0
    %830 = vmatpush1.msra.mxu0 %v323
    %831 = vmatprep.subr.mxu0 0.0
    %832 = vmatpush1.msra.mxu0 %v324
    %833 = vmatprep.subr.mxu0 0.0
    %834 = vmatpush1.msra.mxu0 %v325
    %835 = vmatprep.subr.mxu0 0.0
    %836 = vmatpush1.msra.mxu0 %v326
    %837 = vmatprep.subr.mxu0 0.0
    %838 = vmatpush1.msra.mxu0 %v327
    %839 = vmatprep.subr.mxu0 0.0
    %840 = vmatpush1.msra.mxu0 %v328
    %841 = vmatprep.subr.mxu0 0.0
    %842 = vmatpush1.msra.mxu0 %v329
    %843 = vmatprep.subr.mxu0 0.0
    %844 = vmatpush1.msra.mxu0 %v330
    %845 = vmatprep.subr.mxu0 0.0
    %846 = vmatpush1.msra.mxu0 %v331
    %847 = vmatprep.subr.mxu0 0.0
    %848 = vmatpush1.msra.mxu0 %v332
    %849 = vmatprep.subr.mxu0 0.0
    %850 = vmatpush1.msra.mxu0 %v333
    %851 = vmatprep.subr.mxu0 0.0
    %852 = vmatpush1.msra.mxu0 %v334
    %853 = vmatprep.subr.mxu0 0.0
    %854 = vmatpush1.msra.mxu0 %v335
    %855 = vmatprep.subr.mxu0 0.0
    %856 = vmatpush1.msra.mxu0 %v336
    %857 = vmatprep.subr.mxu0 0.0
    %858 = vmatpush1.msra.mxu0 %v337
    %859 = vmatprep.mubr.f32.mxu0 %v55
    %860 = vmatmul.mubr.f32.gmra.mrb[0].mxu0 %v54
    %v861 = vpop.f32.mrb[0].mxu0
    %v862 = vadd.f32 %v637, %v861
    %v863 = vpop.f32.mrb[0].mxu0
    %864 = vmatprep.mubr.f32.mxu0 %v61
    %865 = vmatmul.mubr.f32.gmra.mrb[0].mxu0 %v60
    %v866 = vpop.f32.mrb[0].mxu0
    %v867 = vadd.f32 %v642, %v866
    %v868 = vpop.f32.mrb[0].mxu0
    %869 = vmatprep.mubr.f32.mxu0 %v67
    %870 = vmatmul.mubr.f32.gmra.mrb[0].mxu0 %v66
    %v871 = vpop.f32.mrb[0].mxu0
    %v872 = vadd.f32 %v647, %v871
    %v873 = vpop.f32.mrb[0].mxu0
    %874 = vmatprep.mubr.f32.mxu0 %v73
    %875 = vmatmul.mubr.f32.gmra.mrb[0].mxu0 %v72
    %v876 = vpop.f32.mrb[0].mxu0
    %v877 = vadd.f32 %v652, %v876
    %v878 = vpop.f32.mrb[0].mxu0
    %879 = vmatprep.mubr.f32.mxu0 %v79
    %880 = vmatmul.mubr.f32.gmra.mrb[0].mxu0 %v78
    %v881 = vpop.f32.mrb[0].mxu0
    %v882 = vadd.f32 %v657, %v881
    %v883 = vpop.f32.mrb[0].mxu0
    %884 = vmatprep.mubr.f32.mxu0 %v85
    %885 = vmatmul.mubr.f32.gmra.mrb[0].mxu0 %v84
    %v886 = vpop.f32.mrb[0].mxu0
    %v887 = vadd.f32 %v662, %v886
    %v888 = vpop.f32.mrb[0].mxu0
    %889 = vmatprep.mubr.f32.mxu0 %v91
    %890 = vmatmul.mubr.f32.gmra.mrb[0].mxu0 %v90
    %v891 = vpop.f32.mrb[0].mxu0
    %v892 = vadd.f32 %v667, %v891
    %v893 = vpop.f32.mrb[0].mxu0
    %894 = vmatprep.mubr.f32.mxu0 %v97
    %895 = vmatmul.mubr.f32.gmra.mrb[0].mxu0 %v96
    %v896 = vpop.f32.mrb[0].mxu0
    %v897 = vadd.f32 %v672, %v896
    %v898 = vpop.f32.mrb[0].mxu0
    %899 = vmatprep.mubr.f32.mxu0 %v103
    %900 = vmatmul.mubr.f32.gmra.mrb[0].mxu0 %v102
    %v901 = vpop.f32.mrb[0].mxu0
    %v902 = vadd.f32 %v677, %v901
    %v903 = vpop.f32.mrb[0].mxu0
    %904 = vmatprep.mubr.f32.mxu0 %v109
    %905 = vmatmul.mubr.f32.gmra.mrb[0].mxu0 %v108
    %v906 = vpop.f32.mrb[0].mxu0
    %v907 = vadd.f32 %v682, %v906
    %v908 = vpop.f32.mrb[0].mxu0
    %909 = vmatprep.mubr.f32.mxu0 %v115
    %910 = vmatmul.mubr.f32.gmra.mrb[0].mxu0 %v114
    %v911 = vpop.f32.mrb[0].mxu0
    %v912 = vadd.f32 %v687, %v911
    %v913 = vpop.f32.mrb[0].mxu0
    %914 = vmatprep.mubr.f32.mxu0 %v121
    %915 = vmatmul.mubr.f32.gmra.mrb[0].mxu0 %v120
    %v916 = vpop.f32.mrb[0].mxu0
    %v917 = vadd.f32 %v692, %v916
    %v918 = vpop.f32.mrb[0].mxu0
    %919 = vmatprep.mubr.f32.mxu0 %v127
    %920 = vmatmul.mubr.f32.gmra.mrb[0].mxu0 %v126
    %v921 = vpop.f32.mrb[0].mxu0
    %v922 = vadd.f32 %v697, %v921
    %v923 = vpop.f32.mrb[0].mxu0
    %924 = vmatprep.mubr.f32.mxu0 %v133
    %925 = vmatmul.mubr.f32.gmra.mrb[0].mxu0 %v132
    %v926 = vpop.f32.mrb[0].mxu0
    %v927 = vadd.f32 %v702, %v926
    %v928 = vpop.f32.mrb[0].mxu0
    %929 = vmatprep.mubr.f32.mxu0 %v139
    %930 = vmatmul.mubr.f32.gmra.mrb[0].mxu0 %v138
    %v931 = vpop.f32.mrb[0].mxu0
    %v932 = vadd.f32 %v707, %v931
    %v933 = vpop.f32.mrb[0].mxu0
    %934 = vmatprep.mubr.f32.mxu0 %v145
    %935 = vmatmul.mubr.f32.gmra.mrb[0].mxu0 %v144
    %v936 = vpop.f32.mrb[0].mxu0
    %v937 = vadd.f32 %v712, %v936
    %v938 = vpop.f32.mrb[0].mxu0
    %939 = vmatprep.mubr.f32.mxu0 %v151
    %940 = vmatmul.mubr.f32.gmra.mrb[0].mxu0 %v150
    %v941 = vpop.f32.mrb[0].mxu0
    %v942 = vadd.f32 %v717, %v941
    %v943 = vpop.f32.mrb[0].mxu0
    %944 = vmatprep.mubr.f32.mxu0 %v157
    %945 = vmatmul.mubr.f32.gmra.mrb[0].mxu0 %v156
    %v946 = vpop.f32.mrb[0].mxu0
    %v947 = vadd.f32 %v722, %v946
    %v948 = vpop.f32.mrb[0].mxu0
    %949 = vmatprep.mubr.f32.mxu0 %v163
    %950 = vmatmul.mubr.f32.gmra.mrb[0].mxu0 %v162
    %v951 = vpop.f32.mrb[0].mxu0
    %v952 = vadd.f32 %v727, %v951
    %v953 = vpop.f32.mrb[0].mxu0
    %954 = vmatprep.mubr.f32.mxu0 %v169
    %955 = vmatmul.mubr.f32.gmra.mrb[0].mxu0 %v168
    %v956 = vpop.f32.mrb[0].mxu0
    %v957 = vadd.f32 %v732, %v956
    %v958 = vpop.f32.mrb[0].mxu0
    %959 = vmatprep.mubr.f32.mxu0 %v175
    %960 = vmatmul.mubr.f32.gmra.mrb[0].mxu0 %v174
    %v961 = vpop.f32.mrb[0].mxu0
    %v962 = vadd.f32 %v737, %v961
    %v963 = vpop.f32.mrb[0].mxu0
    %964 = vmatprep.mubr.f32.mxu0 %v181
    %965 = vmatmul.mubr.f32.gmra.mrb[0].mxu0 %v180
    %v966 = vpop.f32.mrb[0].mxu0
    %v967 = vadd.f32 %v742, %v966
    %v968 = vpop.f32.mrb[0].mxu0
    %969 = vmatprep.mubr.f32.mxu0 %v187
    %970 = vmatmul.mubr.f32.gmra.mrb[0].mxu0 %v186
    %v971 = vpop.f32.mrb[0].mxu0
    %v972 = vadd.f32 %v747, %v971
    %v973 = vpop.f32.mrb[0].mxu0
    %974 = vmatprep.mubr.f32.mxu0 %v193
    %975 = vmatmul.mubr.f32.gmra.mrb[0].mxu0 %v192
    %v976 = vpop.f32.mrb[0].mxu0
    %v977 = vadd.f32 %v752, %v976
    %v978 = vpop.f32.mrb[0].mxu0
    %979 = vmatprep.mubr.f32.mxu0 %v199
    %980 = vmatmul.mubr.f32.gmra.mrb[0].mxu0 %v198
    %v981 = vpop.f32.mrb[0].mxu0
    %v982 = vadd.f32 %v757, %v981
    %v983 = vpop.f32.mrb[0].mxu0
    %984 = vmatprep.mubr.f32.mxu0 %v205
    %985 = vmatmul.mubr.f32.gmra.mrb[0].mxu0 %v204
    %v986 = vpop.f32.mrb[0].mxu0
    %v987 = vadd.f32 %v762, %v986
    %v988 = vpop.f32.mrb[0].mxu0
    %989 = vmatprep.mubr.f32.mxu0 %v211
    %990 = vmatmul.mubr.f32.gmra.mrb[0].mxu0 %v210
    %v991 = vpop.f32.mrb[0].mxu0
    %v992 = vadd.f32 %v767, %v991
    %v993 = vpop.f32.mrb[0].mxu0
    %994 = vmatprep.mubr.f32.mxu0 %v217
    %995 = vmatmul.mubr.f32.gmra.mrb[0].mxu0 %v216
    %v996 = vpop.f32.mrb[0].mxu0
    %v997 = vadd.f32 %v772, %v996
    %v998 = vpop.f32.mrb[0].mxu0
    %999 = vmatprep.mubr.f32.mxu0 %v223
    %1000 = vmatmul.mubr.f32.gmra.mrb[0].mxu0 %v222
    %v1001 = vpop.f32.mrb[0].mxu0
    %v1002 = vadd.f32 %v777, %v1001
    %v1003 = vpop.f32.mrb[0].mxu0
    %1004 = vmatprep.mubr.f32.mxu0 %v229
    %1005 = vmatmul.mubr.f32.gmra.mrb[0].mxu0 %v228
    %v1006 = vpop.f32.mrb[0].mxu0
    %v1007 = vadd.f32 %v782, %v1006
    %v1008 = vpop.f32.mrb[0].mxu0
    %1009 = vmatprep.mubr.f32.mxu0 %v235
    %1010 = vmatmul.mubr.f32.gmra.mrb[0].mxu0 %v234
    %v1011 = vpop.f32.mrb[0].mxu0
    %v1012 = vadd.f32 %v787, %v1011
    %v1013 = vpop.f32.mrb[0].mxu0
    %1014 = vmatprep.mubr.f32.mxu0 %v241
    %1015 = vmatmul.mubr.f32.gmra.mrb[0].mxu0 %v240
    %v1016 = vpop.f32.mrb[0].mxu0
    %v1017 = vadd.f32 %v792, %v1016
    %v1018 = vpop.f32.mrb[0].mxu0
    %1019 = vdwg.mxu0
    %v1020 = vmax.f32 %v862, 0.0
    %v1021 = vmax.f32 %v867, 0.0
    %v1022 = vmax.f32 %v872, 0.0
    %v1023 = vmax.f32 %v877, 0.0
    %v1024 = vmax.f32 %v882, 0.0
    %v1025 = vmax.f32 %v887, 0.0
    %v1026 = vmax.f32 %v892, 0.0
    %v1027 = vmax.f32 %v897, 0.0
    %v1028 = vmax.f32 %v902, 0.0
    %v1029 = vmax.f32 %v907, 0.0
    %v1030 = vmax.f32 %v912, 0.0
    %v1031 = vmax.f32 %v917, 0.0
    %v1032 = vmax.f32 %v922, 0.0
    %v1033 = vmax.f32 %v927, 0.0
    %v1034 = vmax.f32 %v932, 0.0
    %v1035 = vmax.f32 %v937, 0.0
    %v1036 = vmax.f32 %v942, 0.0
    %v1037 = vmax.f32 %v947, 0.0
    %v1038 = vmax.f32 %v952, 0.0
    %v1039 = vmax.f32 %v957, 0.0
    %v1040 = vmax.f32 %v962, 0.0
    %v1041 = vmax.f32 %v967, 0.0
    %v1042 = vmax.f32 %v972, 0.0
    %v1043 = vmax.f32 %v977, 0.0
    %v1044 = vmax.f32 %v982, 0.0
    %v1045 = vmax.f32 %v987, 0.0
    %v1046 = vmax.f32 %v992, 0.0
    %v1047 = vmax.f32 %v997, 0.0
    %v1048 = vmax.f32 %v1002, 0.0
    %v1049 = vmax.f32 %v1007, 0.0
    %v1050 = vmax.f32 %v1012, 0.0
    %v1051 = vmax.f32 %v1017, 0.0
    %v1052 = vld [vmem:[%s3] sm:$0x1]
    %v1054 = vlaneseq
    %v1055 = vshrl.u32 %v1054, 7
    %v1056 = vsub.s32 0, %v1055
    %v1057 = vrot.slane %v1052, %v1056
    %v1059 = vmul.f32 %v1020, %v1057
    %v1060 = vmul.f32 %v1021, %v1057
    %v1061 = vmul.f32 %v1022, %v1057
    %v1062 = vmul.f32 %v1023, %v1057
    %v1063 = vmul.f32 %v1024, %v1057
    %v1064 = vmul.f32 %v1025, %v1057
    %v1065 = vmul.f32 %v1026, %v1057
    %v1066 = vmul.f32 %v1027, %v1057
    %v1067 = vmul.f32 %v1028, %v1057
    %v1068 = vmul.f32 %v1029, %v1057
    %v1069 = vmul.f32 %v1030, %v1057
    %v1070 = vmul.f32 %v1031, %v1057
    %v1071 = vmul.f32 %v1032, %v1057
    %v1072 = vmul.f32 %v1033, %v1057
    %v1073 = vmul.f32 %v1034, %v1057
    %v1074 = vmul.f32 %v1035, %v1057
    %v1075 = vmul.f32 %v1036, %v1057
    %v1076 = vmul.f32 %v1037, %v1057
    %v1077 = vmul.f32 %v1038, %v1057
    %v1078 = vmul.f32 %v1039, %v1057
    %v1079 = vmul.f32 %v1040, %v1057
    %v1080 = vmul.f32 %v1041, %v1057
    %v1081 = vmul.f32 %v1042, %v1057
    %v1082 = vmul.f32 %v1043, %v1057
    %v1083 = vmul.f32 %v1044, %v1057
    %v1084 = vmul.f32 %v1045, %v1057
    %v1085 = vmul.f32 %v1046, %v1057
    %v1086 = vmul.f32 %v1047, %v1057
    %v1087 = vmul.f32 %v1048, %v1057
    %v1088 = vmul.f32 %v1049, %v1057
    %v1089 = vmul.f32 %v1050, %v1057
    %v1090 = vmul.f32 %v1051, %v1057
    %1091 = vadd.xlane.f32.xlu0 %v1059
    %v1092 = vpop.xlane.xlu0 %1091
    %1093 = vadd.xlane.f32.xlu0 %v1060
    %v1094 = vpop.xlane.xlu0 %1093
    %1095 = vadd.xlane.f32.xlu0 %v1061
    %v1096 = vpop.xlane.xlu0 %1095
    %1097 = vadd.xlane.f32.xlu0 %v1062
    %v1098 = vpop.xlane.xlu0 %1097
    %1099 = vadd.xlane.f32.xlu0 %v1063
    %v1100 = vpop.xlane.xlu0 %1099
    %1101 = vadd.xlane.f32.xlu0 %v1064
    %v1102 = vpop.xlane.xlu0 %1101
    %1103 = vadd.xlane.f32.xlu0 %v1065
    %v1104 = vpop.xlane.xlu0 %1103
    %1105 = vadd.xlane.f32.xlu0 %v1066
    %v1106 = vpop.xlane.xlu0 %1105
    %1107 = vadd.xlane.f32.xlu0 %v1067
    %v1108 = vpop.xlane.xlu0 %1107
    %1109 = vadd.xlane.f32.xlu0 %v1068
    %v1110 = vpop.xlane.xlu0 %1109
    %1111 = vadd.xlane.f32.xlu0 %v1069
    %v1112 = vpop.xlane.xlu0 %1111
    %1113 = vadd.xlane.f32.xlu0 %v1070
    %v1114 = vpop.xlane.xlu0 %1113
    %1115 = vadd.xlane.f32.xlu0 %v1071
    %v1116 = vpop.xlane.xlu0 %1115
    %1117 = vadd.xlane.f32.xlu0 %v1072
    %v1118 = vpop.xlane.xlu0 %1117
    %1119 = vadd.xlane.f32.xlu0 %v1073
    %v1120 = vpop.xlane.xlu0 %1119
    %1121 = vadd.xlane.f32.xlu0 %v1074
    %v1122 = vpop.xlane.xlu0 %1121
    %1123 = vadd.xlane.f32.xlu0 %v1075
    %v1124 = vpop.xlane.xlu0 %1123
    %1125 = vadd.xlane.f32.xlu0 %v1076
    %v1126 = vpop.xlane.xlu0 %1125
    %1127 = vadd.xlane.f32.xlu0 %v1077
    %v1128 = vpop.xlane.xlu0 %1127
    %1129 = vadd.xlane.f32.xlu0 %v1078
    %v1130 = vpop.xlane.xlu0 %1129
    %1131 = vadd.xlane.f32.xlu0 %v1079
    %v1132 = vpop.xlane.xlu0 %1131
    %1133 = vadd.xlane.f32.xlu0 %v1080
    %v1134 = vpop.xlane.xlu0 %1133
    %1135 = vadd.xlane.f32.xlu0 %v1081
    %v1136 = vpop.xlane.xlu0 %1135
    %1137 = vadd.xlane.f32.xlu0 %v1082
    %v1138 = vpop.xlane.xlu0 %1137
    %1139 = vadd.xlane.f32.xlu0 %v1083
    %v1140 = vpop.xlane.xlu0 %1139
    %1141 = vadd.xlane.f32.xlu0 %v1084
    %v1142 = vpop.xlane.xlu0 %1141
    %1143 = vadd.xlane.f32.xlu0 %v1085
    %v1144 = vpop.xlane.xlu0 %1143
    %1145 = vadd.xlane.f32.xlu0 %v1086
    %v1146 = vpop.xlane.xlu0 %1145
    %1147 = vadd.xlane.f32.xlu0 %v1087
    %v1148 = vpop.xlane.xlu0 %1147
    %1149 = vadd.xlane.f32.xlu0 %v1088
    %v1150 = vpop.xlane.xlu0 %1149
    %1151 = vadd.xlane.f32.xlu0 %v1089
    %v1152 = vpop.xlane.xlu0 %1151
    %1153 = vadd.xlane.f32.xlu0 %v1090
    %v1154 = vpop.xlane.xlu0 %1153
    %s1155 = sld [smem:[#allocation2]]
    %v1156 = vstv %s1155
    %v1157 = vadd.f32 %v1092, %v1156
    %v1158 = vadd.f32 %v1094, %v1156
    %v1159 = vadd.f32 %v1096, %v1156
    %v1160 = vadd.f32 %v1098, %v1156
    %v1161 = vadd.f32 %v1100, %v1156
    %v1162 = vadd.f32 %v1102, %v1156
    %v1163 = vadd.f32 %v1104, %v1156
    %v1164 = vadd.f32 %v1106, %v1156
    %v1165 = vadd.f32 %v1108, %v1156
    %v1166 = vadd.f32 %v1110, %v1156
    %v1167 = vadd.f32 %v1112, %v1156
    %v1168 = vadd.f32 %v1114, %v1156
    %v1169 = vadd.f32 %v1116, %v1156
    %v1170 = vadd.f32 %v1118, %v1156
    %v1171 = vadd.f32 %v1120, %v1156
    %v1172 = vadd.f32 %v1122, %v1156
    %v1173 = vadd.f32 %v1124, %v1156
    %v1174 = vadd.f32 %v1126, %v1156
    %v1175 = vadd.f32 %v1128, %v1156
    %v1176 = vadd.f32 %v1130, %v1156
    %v1177 = vadd.f32 %v1132, %v1156
    %v1178 = vadd.f32 %v1134, %v1156
    %v1179 = vadd.f32 %v1136, %v1156
    %v1180 = vadd.f32 %v1138, %v1156
    %v1181 = vadd.f32 %v1140, %v1156
    %v1182 = vadd.f32 %v1142, %v1156
    %v1183 = vadd.f32 %v1144, %v1156
    %v1184 = vadd.f32 %v1146, %v1156
    %v1185 = vadd.f32 %v1148, %v1156
    %v1186 = vadd.f32 %v1150, %v1156
    %v1187 = vadd.f32 %v1152, %v1156
    %v1188 = vadd.f32 %v1154, %v1156
    %v1221 = vlaneseq
    %v1222 = vand.u32 %v1221, 127
    %v1223 = vlaneseq
    %v1224 = vshrl.u32 %v1223, 7
    %v1225 = vsub.s32 %v1222, %v1224
    %v1226 = vrot.slane %v1157, %v1225
    %v1227 = vadd.s32 %v1222, 4294967288
    %v1228 = vlaneseq
    %v1229 = vshrl.u32 %v1228, 7
    %v1230 = vsub.s32 %v1227, %v1229
    %v1231 = vrot.slane %v1158, %v1230
    %vm1232 = vcmask 130112
    %v1233 = vsel %vm1232, %v1231, %v1226
    %v1234 = vadd.s32 %v1222, 4294967280
    %v1235 = vlaneseq
    %v1236 = vshrl.u32 %v1235, 7
    %v1237 = vsub.s32 %v1234, %v1236
    %v1238 = vrot.slane %v1159, %v1237
    %vm1239 = vcmask 195712
    %v1240 = vsel %vm1239, %v1238, %v1233
    %v1241 = vadd.s32 %v1222, 4294967272
    %v1242 = vlaneseq
    %v1243 = vshrl.u32 %v1242, 7
    %v1244 = vsub.s32 %v1241, %v1243
    %v1245 = vrot.slane %v1160, %v1244
    %vm1246 = vcmask 261312
    %v1247 = vsel %vm1246, %v1245, %v1240
    %v1248 = vadd.s32 %v1222, 4294967264
    %v1249 = vlaneseq
    %v1250 = vshrl.u32 %v1249, 7
    %v1251 = vsub.s32 %v1248, %v1250
    %v1252 = vrot.slane %v1161, %v1251
    %vm1253 = vcmask 326912
    %v1254 = vsel %vm1253, %v1252, %v1247
    %v1255 = vadd.s32 %v1222, 4294967256
    %v1256 = vlaneseq
    %v1257 = vshrl.u32 %v1256, 7
    %v1258 = vsub.s32 %v1255, %v1257
    %v1259 = vrot.slane %v1162, %v1258
    %vm1260 = vcmask 392512
    %v1261 = vsel %vm1260, %v1259, %v1254
    %v1262 = vadd.s32 %v1222, 4294967248
    %v1263 = vlaneseq
    %v1264 = vshrl.u32 %v1263, 7
    %v1265 = vsub.s32 %v1262, %v1264
    %v1266 = vrot.slane %v1163, %v1265
    %vm1267 = vcmask 458112
    %v1268 = vsel %vm1267, %v1266, %v1261
    %v1269 = vadd.s32 %v1222, 4294967240
    %v1270 = vlaneseq
    %v1271 = vshrl.u32 %v1270, 7
    %v1272 = vsub.s32 %v1269, %v1271
    %v1273 = vrot.slane %v1164, %v1272
    %vm1274 = vcmask 523712
    %v1275 = vsel %vm1274, %v1273, %v1268
    %v1276 = vadd.s32 %v1222, 4294967232
    %v1277 = vlaneseq
    %v1278 = vshrl.u32 %v1277, 7
    %v1279 = vsub.s32 %v1276, %v1278
    %v1280 = vrot.slane %v1165, %v1279
    %vm1281 = vcmask 589312
    %v1282 = vsel %vm1281, %v1280, %v1275
    %v1283 = vadd.s32 %v1222, 4294967224
    %v1284 = vlaneseq
    %v1285 = vshrl.u32 %v1284, 7
    %v1286 = vsub.s32 %v1283, %v1285
    %v1287 = vrot.slane %v1166, %v1286
    %vm1288 = vcmask 654912
    %v1289 = vsel %vm1288, %v1287, %v1282
    %v1290 = vadd.s32 %v1222, 4294967216
    %v1291 = vlaneseq
    %v1292 = vshrl.u32 %v1291, 7
    %v1293 = vsub.s32 %v1290, %v1292
    %v1294 = vrot.slane %v1167, %v1293
    %vm1295 = vcmask 720512
    %v1296 = vsel %vm1295, %v1294, %v1289
    %v1297 = vadd.s32 %v1222, 4294967208
    %v1298 = vlaneseq
    %v1299 = vshrl.u32 %v1298, 7
    %v1300 = vsub.s32 %v1297, %v1299
    %v1301 = vrot.slane %v1168, %v1300
    %vm1302 = vcmask 786112
    %v1303 = vsel %vm1302, %v1301, %v1296
    %v1304 = vadd.s32 %v1222, 4294967200
    %v1305 = vlaneseq
    %v1306 = vshrl.u32 %v1305, 7
    %v1307 = vsub.s32 %v1304, %v1306
    %v1308 = vrot.slane %v1169, %v1307
    %vm1309 = vcmask 851712
    %v1310 = vsel %vm1309, %v1308, %v1303
    %v1311 = vadd.s32 %v1222, 4294967192
    %v1312 = vlaneseq
    %v1313 = vshrl.u32 %v1312, 7
    %v1314 = vsub.s32 %v1311, %v1313
    %v1315 = vrot.slane %v1170, %v1314
    %vm1316 = vcmask 917312
    %v1317 = vsel %vm1316, %v1315, %v1310
    %v1318 = vadd.s32 %v1222, 4294967184
    %v1319 = vlaneseq
    %v1320 = vshrl.u32 %v1319, 7
    %v1321 = vsub.s32 %v1318, %v1320
    %v1322 = vrot.slane %v1171, %v1321
    %vm1323 = vcmask 982912
    %v1324 = vsel %vm1323, %v1322, %v1317
    %v1325 = vadd.s32 %v1222, 4294967176
    %v1326 = vlaneseq
    %v1327 = vshrl.u32 %v1326, 7
    %v1328 = vsub.s32 %v1325, %v1327
    %v1329 = vrot.slane %v1172, %v1328
    %vm1330 = vcmask 1048512
    %v1331 = vsel %vm1330, %v1329, %v1324
    %v1332 = vlaneseq
    %v1333 = vshrl.u32 %v1332, 7
    %v1334 = vsub.s32 %v1222, %v1333
    %v1335 = vrot.slane %v1173, %v1334
    %v1336 = vlaneseq
    %v1337 = vshrl.u32 %v1336, 7
    %v1338 = vsub.s32 %v1227, %v1337
    %v1339 = vrot.slane %v1174, %v1338
    %v1340 = vsel %vm1232, %v1339, %v1335
    %v1341 = vlaneseq
    %v1342 = vshrl.u32 %v1341, 7
    %v1343 = vsub.s32 %v1234, %v1342
    %v1344 = vrot.slane %v1175, %v1343
    %v1345 = vsel %vm1239, %v1344, %v1340
    %v1346 = vlaneseq
    %v1347 = vshrl.u32 %v1346, 7
    %v1348 = vsub.s32 %v1241, %v1347
    %v1349 = vrot.slane %v1176, %v1348
    %v1350 = vsel %vm1246, %v1349, %v1345
    %v1351 = vlaneseq
    %v1352 = vshrl.u32 %v1351, 7
    %v1353 = vsub.s32 %v1248, %v1352
    %v1354 = vrot.slane %v1177, %v1353
    %v1355 = vsel %vm1253, %v1354, %v1350
    %v1356 = vlaneseq
    %v1357 = vshrl.u32 %v1356, 7
    %v1358 = vsub.s32 %v1255, %v1357
    %v1359 = vrot.slane %v1178, %v1358
    %v1360 = vsel %vm1260, %v1359, %v1355
    %v1361 = vlaneseq
    %v1362 = vshrl.u32 %v1361, 7
    %v1363 = vsub.s32 %v1262, %v1362
    %v1364 = vrot.slane %v1179, %v1363
    %v1365 = vsel %vm1267, %v1364, %v1360
    %v1366 = vlaneseq
    %v1367 = vshrl.u32 %v1366, 7
    %v1368 = vsub.s32 %v1269, %v1367
    %v1369 = vrot.slane %v1180, %v1368
    %v1370 = vsel %vm1274, %v1369, %v1365
    %v1371 = vlaneseq
    %v1372 = vshrl.u32 %v1371, 7
    %v1373 = vsub.s32 %v1276, %v1372
    %v1374 = vrot.slane %v1181, %v1373
    %v1375 = vsel %vm1281, %v1374, %v1370
    %v1376 = vlaneseq
    %v1377 = vshrl.u32 %v1376, 7
    %v1378 = vsub.s32 %v1283, %v1377
    %v1379 = vrot.slane %v1182, %v1378
    %v1380 = vsel %vm1288, %v1379, %v1375
    %v1381 = vlaneseq
    %v1382 = vshrl.u32 %v1381, 7
    %v1383 = vsub.s32 %v1290, %v1382
    %v1384 = vrot.slane %v1183, %v1383
    %v1385 = vsel %vm1295, %v1384, %v1380
    %v1386 = vlaneseq
    %v1387 = vshrl.u32 %v1386, 7
    %v1388 = vsub.s32 %v1297, %v1387
    %v1389 = vrot.slane %v1184, %v1388
    %v1390 = vsel %vm1302, %v1389, %v1385
    %v1391 = vlaneseq
    %v1392 = vshrl.u32 %v1391, 7
    %v1393 = vsub.s32 %v1304, %v1392
    %v1394 = vrot.slane %v1185, %v1393
    %v1395 = vsel %vm1309, %v1394, %v1390
    %v1396 = vlaneseq
    %v1397 = vshrl.u32 %v1396, 7
    %v1398 = vsub.s32 %v1311, %v1397
    %v1399 = vrot.slane %v1186, %v1398
    %v1400 = vsel %vm1316, %v1399, %v1395
    %v1401 = vlaneseq
    %v1402 = vshrl.u32 %v1401, 7
    %v1403 = vsub.s32 %v1318, %v1402
    %v1404 = vrot.slane %v1187, %v1403
    %v1405 = vsel %vm1323, %v1404, %v1400
    %v1406 = vlaneseq
    %v1407 = vshrl.u32 %v1406, 7
    %v1408 = vsub.s32 %v1325, %v1407
    %v1409 = vrot.slane %v1188, %v1408
    %v1410 = vsel %vm1330, %v1409, %v1405
    %vm1411 = vcmask 1041409
    %v1412 = vsel %vm1411, %v1410, %v1331
    %1414 = vst [vmem:[#allocation8] sm:$0x3] %v1412
    // Predicated region
    $region30: #{tpu_custom_call.1} parent=1 // pred_check
      _
    $region31: #{tpu_custom_call.1} parent=1 // pred_check_branch
      %1416 = sbr.rel (0) target = $region33
    $region32: #{tpu_custom_call.1} parent=1 // pred_region
      %s1418 = ssub.s32 32, 32
      %1419 = vsyncadd [#allocation5], %s1418
      %s1421 = sshll.u32 [#allocation8], 4
      %s1422 = int_to_ptr.vmem [resolvable:$true] %s1421
      %1424 = dma.vmem_to_hbm [thread:$0]  %s1422, 32, %s5, [#allocation5]
    $region33: #{tpu_custom_call.1} parent=1 // pred_fallthru
      _
    // Predicated region
    $region34: #{tpu_custom_call.1} parent=1 // pred_check
      _
    $region35: #{tpu_custom_call.1} parent=1 // pred_check_branch
      %1426 = sbr.rel (0) target = $region37
    $region36: #{tpu_custom_call.1} parent=1 // pred_region
      %1427 = dma.done [#allocation5], 32
    $region37: #{tpu_custom_call.1} parent=1 // pred_fallthru
      _
    %1428 = vsyncpa [#allocation4], 1
    %1429 = vsyncpa [#allocation7], 1
    %1430 = vsyncpa [#allocation5], 1

</llo_original>
